<compile_context>
chip_gen: v7x
topology: tpu7x:2x2x1
jax: 0.10.0
libtpu: 0.0.40
codegen_flags: <defaults>
</compile_context>

<pallas_src>
import functools

import jax
import jax.numpy as jnp
from jax.experimental import pallas as pl
from jax.experimental.pallas import tpu as pltpu

# ---------------- config (DETR-style defaults, small synthetic shapes) ----------------
NUM_CLASS = 4          # args.numClass  -> logits have NUM_CLASS + 1 entries
CLASS_COST = 1.0       # args.classCost
BBOX_COST = 5.0        # args.bboxCost
GIOU_COST = 2.0        # args.giouCost
EOS_COST = 0.1         # args.eosCost   (emptyWeight[-1])
B, Q, K = 2, 8, 3      # batch, queries (numQuery*numDecoderLayer), gt objects per image
CP1 = NUM_CLASS + 1
N = B * K              # matched (pred, gt) pairs per layer


# ================= fused Pallas kernel: CE + box losses + AP metrics =================
def _criterion_kernel(w_ref, lg_ref, tgt_ref, pb_ref, tb_ref, ml_ref, lbl_ref, msk_ref,
                      out_ref, *, class_cost, bbox_cost, giou_cost):
    f32 = jnp.float32

    # ---------------- weighted cross entropy over all queries ----------------
    lg = lg_ref[...].astype(f32)      # [C+1, B*Q]  classes on sublanes, queries on lanes
    tgt = tgt_ref[...]                # [1,   B*Q]  int32 target class per query
    w = w_ref[...].astype(f32)        # [1,   C+1]  emptyWeight buffer
    cp1 = lg.shape[0]

    # log-softmax over the small static class axis, unrolled -> pure VPU selects
    m = lg[0:1, :]
    for c in range(1, cp1):
        m = jnp.maximum(m, lg[c:c + 1, :])
    s = jnp.zeros_like(m)
    for c in range(cp1):
        s = s + jnp.exp(lg[c:c + 1, :] - m)
    lse = jnp.log(s)                                              # [1, B*Q]

    nll = jnp.zeros_like(m)
    wt = jnp.zeros_like(m)
    for c in range(cp1):
        hit = tgt == c
        nll = jnp.where(hit, -(lg[c:c + 1, :] - m - lse), nll)
        wt = jnp.where(hit, w[0:1, c:c + 1], wt)

    # torch weighted cross_entropy (mean): sum(w_t * nll) / sum(w_t)
    ce_num = jnp.sum(wt * nll, axis=(0, 1), keepdims=True)
    ce_den = jnp.sum(wt, axis=(0, 1), keepdims=True)
    cls_loss = class_cost * ce_num * pl.reciprocal(ce_den, approx=True)

    # ---------------- matched-pair box losses ----------------
    pb = pb_ref[...].astype(f32)      # [4, N]   matched predicted boxes (cxcywh)
    tb = tb_ref[...].astype(f32)      # [4, N]   matched target boxes   (cxcywh)
    ml = ml_ref[...].astype(f32)      # [C+1, N] matched logits
    lbl = lbl_ref[...]                # [1, N]   int32 target labels
    msk = msk_ref[...].astype(f32)    # [1, N]   1.0 where target label != numClass

    # numBoxes = len(targetBoxes) + 1e-6  (matches the reference module exactly)
    nb = jnp.sum(msk, axis=(0, 1), keepdims=True) + 1e-6
    inv_nb = pl.reciprocal(nb, approx=True)

    l1 = jnp.sum(jnp.abs(pb - tb) * msk, axis=(0, 1), keepdims=True)
    bbox_loss = bbox_cost * l1 * inv_nb

    def xyxy(b):
        cx, cy, bw, bh = b[0:1, :], b[1:2, :], b[2:3, :], b[3:4, :]
        return cx - 0.5 * bw, cy - 0.5 * bh, cx + 0.5 * bw, cy + 0.5 * bh

    px0, py0, px1, py1 = xyxy(pb)
    tx0, ty0, tx1, ty1 = xyxy(tb)
    area_p = (px1 - px0) * (py1 - py0)
    area_t = (tx1 - tx0) * (ty1 - ty0)
    iw = jnp.maximum(jnp.minimum(px1, tx1) - jnp.maximum(px0, tx0), 0.0)
    ih = jnp.maximum(jnp.minimum(py1, ty1) - jnp.maximum(py0, ty0), 0.0)
    inter = iw * ih
    union = area_p + area_t - inter
    ew = jnp.maximum(px1, tx1) - jnp.minimum(px0, tx0)
    eh = jnp.maximum(py1, ty1) - jnp.minimum(py0, ty0)
    enclose = ew * eh

    # guard masked / degenerate rows so NaN/inf never reaches the masked sums
    valid = msk > 0.0
    safe_union = jnp.where(valid & (union > 0.0), union, 1.0)
    safe_enclose = jnp.where(valid & (enclose > 0.0), enclose, 1.0)
    iou = jnp.where(valid, inter * pl.reciprocal(safe_union, approx=True), 0.0)
    giou = jnp.where(
        valid, iou - (enclose - union) * pl.reciprocal(safe_enclose, approx=True), 0.0)
    giou_loss = giou_cost * jnp.sum((1.0 - giou) * msk, axis=(0, 1), keepdims=True) * inv_nb

    # ---------------- metrics (torch.no_grad block) ----------------
    # argmax(softmax(logits)) == argmax(logits); unrolled -> first max index (VPU selects)
    best = ml[0:1, :]
    best_idx = jnp.zeros_like(lbl)
    for c in range(1, cp1):
        cur = ml[c:c + 1, :]
        take = cur > best
        best = jnp.where(take, cur, best)
        best_idx = jnp.where(take, c, best_idx)
    class_mask = (best_idx == lbl).astype(f32) * msk              # [1, N]

    # all 10 IoU thresholds at once: one compare on a [10, N] tile + one lane reduction
    thr = 0.01 * (50.0 + 5.0 * jax.lax.broadcasted_iota(jnp.int32, (10, 1), 0).astype(f32))
    hits = (iou >= thr).astype(f32) * class_mask                  # [10, N]
    ap_thr = jnp.sum(hits, axis=1, keepdims=True) * inv_nb        # [10, 1]
    ap = jnp.sum(ap_thr, axis=(0, 1), keepdims=True) * 0.1        # mean over thresholds
    ap50 = ap_thr[0:1, :]
    ap75 = ap_thr[5:6, :]
    ap95 = ap_thr[9:10, :]

    # -------- pack the 7 scalars into one lane-dense (8,128) output tile --------
    lane = jax.lax.broadcasted_iota(jnp.int32, (8, 128), 1)
    sub = jax.lax.broadcasted_iota(jnp.int32, (8, 128), 0)
    packed = jnp.zeros((8, 128), f32)
    for i, v in enumerate((cls_loss, bbox_loss, giou_loss, ap, ap50, ap75, ap95)):
        packed = jnp.where((sub == 0) & (lane == i), v, packed)
    out_ref[...] = packed


def _run_criterion_kernel(ew2, logits_t, tgt_t, pb_t, tb_t, ml_t, lbl_row, msk_row,
                          class_cost, bbox_cost, giou_cost):
    L, cp1, bq = logits_t.shape
    n = pb_t.shape[-1]
    kernel = functools.partial(_criterion_kernel, class_cost=class_cost,
                               bbox_cost=bbox_cost, giou_cost=giou_cost)
    out = pl.pallas_call(
        kernel,
        out_shape=jax.ShapeDtypeStruct((L, 8, 128), jnp.float32),
        grid_spec=pltpu.PrefetchScalarGridSpec(
            num_scalar_prefetch=0,
            grid=(L,),
            in_specs=[
                pl.BlockSpec((1, cp1), lambda l: (0, 0)),            # emptyWeight
                pl.BlockSpec((None, cp1, bq), lambda l: (l, 0, 0)),  # logits   [C+1, B*Q]
                pl.BlockSpec((None, 1, bq), lambda l: (l, 0, 0)),    # target class map
                pl.BlockSpec((None, 4, n), lambda l: (l, 0, 0)),     # matched pred boxes
                pl.BlockSpec((4, n), lambda l: (0, 0)),              # target boxes
                pl.BlockSpec((None, cp1, n), lambda l: (l, 0, 0)),   # matched logits
                pl.BlockSpec((1, n), lambda l: (0, 0)),              # matched labels
                pl.BlockSpec((1, n), lambda l: (0, 0)),              # valid-pair mask
            ],
            out_specs=pl.BlockSpec((None, 8, 128), lambda l: (l, 0, 0)),
        ),
        compiler_params=pltpu.CompilerParams(
            dimension_semantics=("parallel",)),   # layers independent -> 2 TCs on v7x
    )(ew2, logits_t, tgt_t, pb_t, tb_t, ml_t, lbl_row, msk_row)
    return out[:, 0, :7]   # [L, 7] = cls, bbox, giou, mAP, mAP_50, mAP_75, mAP_95


# ============================ plain-JAX glue (matcher etc.) ============================
def box_cxcywh_to_xyxy(b):
    cx, cy, w, h = b[..., 0], b[..., 1], b[..., 2], b[..., 3]
    return jnp.stack([cx - 0.5 * w, cy - 0.5 * h, cx + 0.5 * w, cy + 0.5 * h], axis=-1)


def _pairwise_giou(a, b):     # a [Q,4] xyxy, b [K,4] xyxy -> [Q,K]
    area_a = (a[:, 2] - a[:, 0]) * (a[:, 3] - a[:, 1])
    area_b = (b[:, 2] - b[:, 0]) * (b[:, 3] - b[:, 1])
    lt = jnp.maximum(a[:, None, :2], b[None, :, :2])
    rb = jnp.minimum(a[:, None, 2:], b[None, :, 2:])
    wh = jnp.clip(rb - lt, 0.0)
    inter = wh[..., 0] * wh[..., 1]
    union = area_a[:, None] + area_b[None, :] - inter
    iou = inter / union
    lt_e = jnp.minimum(a[:, None, :2], b[None, :, :2])
    rb_e = jnp.maximum(a[:, None, 2:], b[None, :, 2:])
    wh_e = jnp.clip(rb_e - lt_e, 0.0)
    enclose = wh_e[..., 0] * wh_e[..., 1]
    return iou - (enclose - union) / enclose


# TODO(synk): HungarianMatcher uses scipy.optimize.linear_sum_assignment (host-side, data
# dependent) with no Pallas/JAX equivalent; replaced with a vmapped greedy assignment on
# the same DETR cost matrix.
def _greedy_match_one(logits, boxes, labels, tboxes):
    prob = jax.nn.softmax(logits.astype(jnp.float32), axis=-1)      # [Q, C+1]
    cost_class = -prob[:, labels]                                   # [Q, K]
    cost_bbox = jnp.sum(jnp.abs(boxes[:, None, :] - tboxes[None, :, :]), axis=-1)
    cost_giou = -_pairwise_giou(box_cxcywh_to_xyxy(boxes), box_cxcywh_to_xyxy(tboxes))
    cmat = BBOX_COST * cost_bbox + CLASS_COST * cost_class + GIOU_COST * cost_giou
    nq, nk = cmat.shape

    def body(o, carry):
        used, picks = carry
        col = jax.lax.dynamic_index_in_dim(cmat, o, axis=1, keepdims=False)
        col = jnp.where(used, jnp.inf, col)
        q = jnp.argmin(col).astype(jnp.int32)
        return used.at[q].set(True), picks.at[o].set(q)

    used0 = jnp.zeros((nq,), jnp.bool_)
    picks0 = jnp.zeros((nk,), jnp.int32)
    _, picks = jax.lax.fori_loop(0, nk, body, (used0, picks0))
    return picks                                                    # [K]


@jax.jit
def _criterion_packed(logits_all, boxes_all, labels, tgt_boxes, empty_weight):
    L, Bc, Qc, cp1 = logits_all.shape
    Kc = labels.shape[1]
    n = Bc * Kc
    bq = Bc * Qc

    # --- per-layer, per-image matching (vectorized over L*B images) ---
    lf = logits_all.reshape(L * Bc, Qc, cp1)
    bf = boxes_all.reshape(L * Bc, Qc, 4)
    lab = jnp.tile(labels, (L, 1))
    tbx = jnp.tile(tgt_boxes, (L, 1, 1))
    src_idx = jax.vmap(_greedy_match_one)(lf, bf, lab, tbx).reshape(L, Bc, Kc)

    l_idx = jnp.broadcast_to(jnp.arange(L)[:, None, None], (L, Bc, Kc))
    b_idx = jnp.broadcast_to(jnp.arange(Bc)[None, :, None], (L, Bc, Kc))

    # target class map: numClass everywhere, gt label at the matched query slots
    target_class = jnp.full((L, Bc, Qc), NUM_CLASS, jnp.int32)
    target_class = target_class.at[l_idx, b_idx, src_idx].set(
        jnp.broadcast_to(labels[None].astype(jnp.int32), (L, Bc, Kc)))

    matched_boxes = boxes_all[l_idx, b_idx, src_idx]      # [L, B, K, 4]
    matched_logits = logits_all[l_idx, b_idx, src_idx]    # [L, B, K, C+1]

    # --- kernel layouts: class / coord on sublanes, queries / pairs on the 128-lane axis ---
    logits_t = jnp.transpose(logits_all.reshape(L, bq, cp1), (0, 2, 1))   # [L, C+1, B*Q]
    tgt_t = target_class.reshape(L, 1, bq)                                # [L, 1, B*Q]
    pb_t = jnp.transpose(matched_boxes.reshape(L, n, 4), (0, 2, 1))       # [L, 4, N]
    ml_t = jnp.transpose(matched_logits.reshape(L, n, cp1), (0, 2, 1))    # [L, C+1, N]
    tb_t = jnp.transpose(tgt_boxes.reshape(n, 4), (1, 0))                 # [4, N]
    lbl_row = labels.reshape(1, n).astype(jnp.int32)                      # [1, N]
    msk_row = (lbl_row != NUM_CLASS).astype(jnp.float32)                  # [1, N]
    ew2 = empty_weight.reshape(1, cp1)

    return _run_criterion_kernel(ew2, logits_t, tgt_t, pb_t, tb_t, ml_t, lbl_row, msk_row,
                                 CLASS_COST, BBOX_COST, GIOU_COST)


_LOSS_NAMES = ('classification loss', 'bbox loss', 'gIoU loss',
               'mAP', 'mAP_50', 'mAP_75', 'mAP_95')


def transformer_criterion_forward(x, y_labels, y_boxes, empty_weight):
    # stack main head + all aux decoder layers on a leading layer axis -> one pallas_call
    logits_all = jnp.stack([x['class']] + [a['class'] for a in x['aux']], axis=0)
    boxes_all = jnp.stack([x['bbox']] + [a['bbox'] for a in x['aux']], axis=0)
    packed = _criterion_packed(logits_all, boxes_all, y_labels, y_boxes, empty_weight)

    out = {name: packed[0, j] for j, name in enumerate(_LOSS_NAMES)}
    for i in range(len(x['aux'])):
        out.update({f'{name}_aux{i}': packed[i + 1, j]
                    for j, name in enumerate(_LOSS_NAMES)})
    return out


if __name__ == "__main__":
    key = jax.random.PRNGKey(0)
    k1, k2, k3, k4, k5, k6 = jax.random.split(key, 6)

    # model predictions (main head + one aux decoder layer)
    logits = jax.random.normal(k1, (B, Q, CP1), jnp.float32)
    bbox = jax.nn.sigmoid(jax.random.normal(k2, (B, Q, 4), jnp.float32))
    aux_logits = jax.random.normal(k3, (B, Q, CP1), jnp.float32)
    aux_bbox = jax.nn.sigmoid(jax.random.normal(k4, (B, Q, 4), jnp.float32))

    # ground truth (K objects per image)
    labels = jax.random.randint(k5, (B, K), 0, NUM_CLASS, jnp.int32)
    cxcy = jax.random.uniform(k6, (B, K, 2), jnp.float32, 0.25, 0.75)
    wh = jax.random.uniform(jax.random.fold_in(k6, 1), (B, K, 2), jnp.float32, 0.1, 0.3)
    gt_boxes = jnp.concatenate([cxcy, wh], axis=-1)

    # buffer from __init__: emptyWeight = ones(numClass+1); emptyWeight[-1] = eosCost
    empty_weight = jnp.ones((CP1,), jnp.float32).at[-1].set(EOS_COST)

    x = {'class': logits, 'bbox': bbox,
         'aux': [{'class': aux_logits, 'bbox': aux_bbox}]}

    out = transformer_criterion_forward(x, labels, gt_boxes, empty_weight)
    out = jax.tree_util.tree_map(jax.block_until_ready, out)
    print("KERNEL_OK")
</pallas_src>

<mosaic_0001>
module attributes {stable_mosaic.version = 11 : i64} {
  func.func @_criterion_kernel(%arg0: i32, %arg1: memref<1x5xf32, #tpu.memory_space<vmem>>, %arg2: memref<1x5x16xf32, #tpu.memory_space<vmem>>, %arg3: memref<1x1x16xi32, #tpu.memory_space<vmem>>, %arg4: memref<1x4x6xf32, #tpu.memory_space<vmem>>, %arg5: memref<4x6xf32, #tpu.memory_space<vmem>>, %arg6: memref<1x5x6xf32, #tpu.memory_space<vmem>>, %arg7: memref<1x6xi32, #tpu.memory_space<vmem>>, %arg8: memref<1x6xf32, #tpu.memory_space<vmem>>, %arg9: memref<1x8x128xf32, #tpu.memory_space<vmem>>) attributes {dimension_semantics = [#tpu.dimension_semantics<parallel>], iteration_bounds = array<i64: 2>, scalar_prefetch = 0 : i64, scratch_operands = 0 : i64, tpu.core_type = #tpu.core_type<tc>, window_params = [{pipeline_mode = #tpu.pipeline_mode<synchronous>, transform_indices = @transform_0, window_bounds = array<i64: 1, 5>}, {transform_indices = @transform_1, window_bounds = array<i64: 1, 5, 16>}, {transform_indices = @transform_2, window_bounds = array<i64: 1, 1, 16>}, {transform_indices = @transform_3, window_bounds = array<i64: 1, 4, 6>}, {pipeline_mode = #tpu.pipeline_mode<synchronous>, transform_indices = @transform_4, window_bounds = array<i64: 4, 6>}, {transform_indices = @transform_5, window_bounds = array<i64: 1, 5, 6>}, {pipeline_mode = #tpu.pipeline_mode<synchronous>, transform_indices = @transform_6, window_bounds = array<i64: 1, 6>}, {pipeline_mode = #tpu.pipeline_mode<synchronous>, transform_indices = @transform_7, window_bounds = array<i64: 1, 6>}, {transform_indices = @transform_8, window_bounds = array<i64: 1, 8, 128>}]} {
    %c0 = arith.constant 0 : index
    %c0_0 = arith.constant 0 : index
    %c0_1 = arith.constant 0 : index
    %0 = vector.load %arg2[%c0, %c0_0, %c0_1] : memref<1x5x16xf32, #tpu.memory_space<vmem>>, vector<1x5x16xf32>
    %1 = vector.shape_cast %0 : vector<1x5x16xf32> to vector<5x16xf32>
    %c0_2 = arith.constant 0 : index
    %c0_3 = arith.constant 0 : index
    %c0_4 = arith.constant 0 : index
    %2 = vector.load %arg3[%c0_2, %c0_3, %c0_4] : memref<1x1x16xi32, #tpu.memory_space<vmem>>, vector<1x1x16xi32>
    %3 = vector.shape_cast %2 : vector<1x1x16xi32> to vector<1x16xi32>
    %c0_5 = arith.constant 0 : index
    %c0_6 = arith.constant 0 : index
    %4 = vector.load %arg1[%c0_5, %c0_6] : memref<1x5xf32, #tpu.memory_space<vmem>>, vector<1x5xf32>
    %5 = vector.extract_strided_slice %1 {offsets = [0, 0], sizes = [1, 16], strides = [1, 1]} : vector<5x16xf32> to vector<1x16xf32>
    %6 = vector.extract_strided_slice %1 {offsets = [1, 0], sizes = [1, 16], strides = [1, 1]} : vector<5x16xf32> to vector<1x16xf32>
    %7 = arith.maximumf %5, %6 : vector<1x16xf32>
    %8 = vector.extract_strided_slice %1 {offsets = [2, 0], sizes = [1, 16], strides = [1, 1]} : vector<5x16xf32> to vector<1x16xf32>
    %9 = arith.maximumf %7, %8 : vector<1x16xf32>
    %10 = vector.extract_strided_slice %1 {offsets = [3, 0], sizes = [1, 16], strides = [1, 1]} : vector<5x16xf32> to vector<1x16xf32>
    %11 = arith.maximumf %9, %10 : vector<1x16xf32>
    %12 = vector.extract_strided_slice %1 {offsets = [4, 0], sizes = [1, 16], strides = [1, 1]} : vector<5x16xf32> to vector<1x16xf32>
    %13 = arith.maximumf %11, %12 : vector<1x16xf32>
    %cst = arith.constant 0.000000e+00 : f32
    %14 = vector.broadcast %cst : f32 to vector<1x16xf32>
    %15 = vector.extract_strided_slice %1 {offsets = [0, 0], sizes = [1, 16], strides = [1, 1]} : vector<5x16xf32> to vector<1x16xf32>
    %16 = arith.subf %15, %13 : vector<1x16xf32>
    %17 = math.exp %16 : vector<1x16xf32>
    %18 = arith.addf %14, %17 : vector<1x16xf32>
    %19 = vector.extract_strided_slice %1 {offsets = [1, 0], sizes = [1, 16], strides = [1, 1]} : vector<5x16xf32> to vector<1x16xf32>
    %20 = arith.subf %19, %13 : vector<1x16xf32>
    %21 = math.exp %20 : vector<1x16xf32>
    %22 = arith.addf %18, %21 : vector<1x16xf32>
    %23 = vector.extract_strided_slice %1 {offsets = [2, 0], sizes = [1, 16], strides = [1, 1]} : vector<5x16xf32> to vector<1x16xf32>
    %24 = arith.subf %23, %13 : vector<1x16xf32>
    %25 = math.exp %24 : vector<1x16xf32>
    %26 = arith.addf %22, %25 : vector<1x16xf32>
    %27 = vector.extract_strided_slice %1 {offsets = [3, 0], sizes = [1, 16], strides = [1, 1]} : vector<5x16xf32> to vector<1x16xf32>
    %28 = arith.subf %27, %13 : vector<1x16xf32>
    %29 = math.exp %28 : vector<1x16xf32>
    %30 = arith.addf %26, %29 : vector<1x16xf32>
    %31 = vector.extract_strided_slice %1 {offsets = [4, 0], sizes = [1, 16], strides = [1, 1]} : vector<5x16xf32> to vector<1x16xf32>
    %32 = arith.subf %31, %13 : vector<1x16xf32>
    %33 = math.exp %32 : vector<1x16xf32>
    %34 = arith.addf %30, %33 : vector<1x16xf32>
    %35 = math.log %34 : vector<1x16xf32>
    %cst_7 = arith.constant 0.000000e+00 : f32
    %36 = vector.broadcast %cst_7 : f32 to vector<1x16xf32>
    %cst_8 = arith.constant 0.000000e+00 : f32
    %37 = vector.broadcast %cst_8 : f32 to vector<1x16xf32>
    %c0_i32 = arith.constant 0 : i32
    %38 = vector.broadcast %c0_i32 : i32 to vector<1x16xi32>
    %39 = arith.cmpi eq, %3, %38 : vector<1x16xi32>
    %40 = vector.extract_strided_slice %1 {offsets = [0, 0], sizes = [1, 16], strides = [1, 1]} : vector<5x16xf32> to vector<1x16xf32>
    %41 = arith.subf %40, %13 : vector<1x16xf32>
    %42 = arith.subf %41, %35 : vector<1x16xf32>
    %cst_9 = arith.constant 0.000000e+00 : f32
    %43 = vector.broadcast %cst_9 : f32 to vector<1x16xf32>
    %44 = arith.subf %43, %42 : vector<1x16xf32>
    %45 = arith.select %39, %44, %36 : vector<1x16xi1>, vector<1x16xf32>
    %46 = vector.extract_strided_slice %4 {offsets = [0, 0], sizes = [1, 1], strides = [1, 1]} : vector<1x5xf32> to vector<1x1xf32>
    %47 = vector.shape_cast %46 : vector<1x1xf32> to vector<1x1xf32>
    %48 = vector.broadcast %47 : vector<1x1xf32> to vector<1x16xf32>
    %49 = arith.select %39, %48, %37 : vector<1x16xi1>, vector<1x16xf32>
    %c1_i32 = arith.constant 1 : i32
    %50 = vector.broadcast %c1_i32 : i32 to vector<1x16xi32>
    %51 = arith.cmpi eq, %3, %50 : vector<1x16xi32>
    %52 = vector.extract_strided_slice %1 {offsets = [1, 0], sizes = [1, 16], strides = [1, 1]} : vector<5x16xf32> to vector<1x16xf32>
    %53 = arith.subf %52, %13 : vector<1x16xf32>
    %54 = arith.subf %53, %35 : vector<1x16xf32>
    %cst_10 = arith.constant 0.000000e+00 : f32
    %55 = vector.broadcast %cst_10 : f32 to vector<1x16xf32>
    %56 = arith.subf %55, %54 : vector<1x16xf32>
    %57 = arith.select %51, %56, %45 : vector<1x16xi1>, vector<1x16xf32>
    %58 = vector.extract_strided_slice %4 {offsets = [0, 1], sizes = [1, 1], strides = [1, 1]} : vector<1x5xf32> to vector<1x1xf32>
    %59 = vector.shape_cast %58 : vector<1x1xf32> to vector<1x1xf32>
    %60 = vector.broadcast %59 : vector<1x1xf32> to vector<1x16xf32>
    %61 = arith.select %51, %60, %49 : vector<1x16xi1>, vector<1x16xf32>
    %c2_i32 = arith.constant 2 : i32
    %62 = vector.broadcast %c2_i32 : i32 to vector<1x16xi32>
    %63 = arith.cmpi eq, %3, %62 : vector<1x16xi32>
    %64 = vector.extract_strided_slice %1 {offsets = [2, 0], sizes = [1, 16], strides = [1, 1]} : vector<5x16xf32> to vector<1x16xf32>
    %65 = arith.subf %64, %13 : vector<1x16xf32>
    %66 = arith.subf %65, %35 : vector<1x16xf32>
    %cst_11 = arith.constant 0.000000e+00 : f32
    %67 = vector.broadcast %cst_11 : f32 to vector<1x16xf32>
    %68 = arith.subf %67, %66 : vector<1x16xf32>
    %69 = arith.select %63, %68, %57 : vector<1x16xi1>, vector<1x16xf32>
    %70 = vector.extract_strided_slice %4 {offsets = [0, 2], sizes = [1, 1], strides = [1, 1]} : vector<1x5xf32> to vector<1x1xf32>
    %71 = vector.shape_cast %70 : vector<1x1xf32> to vector<1x1xf32>
    %72 = vector.broadcast %71 : vector<1x1xf32> to vector<1x16xf32>
    %73 = arith.select %63, %72, %61 : vector<1x16xi1>, vector<1x16xf32>
    %c3_i32 = arith.constant 3 : i32
    %74 = vector.broadcast %c3_i32 : i32 to vector<1x16xi32>
    %75 = arith.cmpi eq, %3, %74 : vector<1x16xi32>
    %76 = vector.extract_strided_slice %1 {offsets = [3, 0], sizes = [1, 16], strides = [1, 1]} : vector<5x16xf32> to vector<1x16xf32>
    %77 = arith.subf %76, %13 : vector<1x16xf32>
    %78 = arith.subf %77, %35 : vector<1x16xf32>
    %cst_12 = arith.constant 0.000000e+00 : f32
    %79 = vector.broadcast %cst_12 : f32 to vector<1x16xf32>
    %80 = arith.subf %79, %78 : vector<1x16xf32>
    %81 = arith.select %75, %80, %69 : vector<1x16xi1>, vector<1x16xf32>
    %82 = vector.extract_strided_slice %4 {offsets = [0, 3], sizes = [1, 1], strides = [1, 1]} : vector<1x5xf32> to vector<1x1xf32>
    %83 = vector.shape_cast %82 : vector<1x1xf32> to vector<1x1xf32>
    %84 = vector.broadcast %83 : vector<1x1xf32> to vector<1x16xf32>
    %85 = arith.select %75, %84, %73 : vector<1x16xi1>, vector<1x16xf32>
    %c4_i32 = arith.constant 4 : i32
    %86 = vector.broadcast %c4_i32 : i32 to vector<1x16xi32>
    %87 = arith.cmpi eq, %3, %86 : vector<1x16xi32>
    %88 = vector.extract_strided_slice %1 {offsets = [4, 0], sizes = [1, 16], strides = [1, 1]} : vector<5x16xf32> to vector<1x16xf32>
    %89 = arith.subf %88, %13 : vector<1x16xf32>
    %90 = arith.subf %89, %35 : vector<1x16xf32>
    %cst_13 = arith.constant 0.000000e+00 : f32
    %91 = vector.broadcast %cst_13 : f32 to vector<1x16xf32>
    %92 = arith.subf %91, %90 : vector<1x16xf32>
    %93 = arith.select %87, %92, %81 : vector<1x16xi1>, vector<1x16xf32>
    %94 = vector.extract_strided_slice %4 {offsets = [0, 4], sizes = [1, 1], strides = [1, 1]} : vector<1x5xf32> to vector<1x1xf32>
    %95 = vector.shape_cast %94 : vector<1x1xf32> to vector<1x1xf32>
    %96 = vector.broadcast %95 : vector<1x1xf32> to vector<1x16xf32>
    %97 = arith.select %87, %96, %85 : vector<1x16xi1>, vector<1x16xf32>
    %98 = arith.mulf %97, %93 : vector<1x16xf32>
    %99 = vector.shape_cast %98 : vector<1x16xf32> to vector<1x1x16xf32>
    %cst_14 = arith.constant dense<0.000000e+00> : vector<1xf32>
    %100 = vector.multi_reduction <add>, %99, %cst_14 [1, 2] : vector<1x1x16xf32> to vector<1xf32>
    %101 = vector.shape_cast %100 : vector<1xf32> to vector<1x1x1xf32>
    %102 = vector.extract %101[0, 0, 0] : f32 from vector<1x1x1xf32>
    %103 = vector.broadcast %102 : f32 to vector<1x1xf32>
    %104 = vector.shape_cast %97 : vector<1x16xf32> to vector<1x1x16xf32>
    %cst_15 = arith.constant dense<0.000000e+00> : vector<1xf32>
    %105 = vector.multi_reduction <add>, %104, %cst_15 [1, 2] : vector<1x1x16xf32> to vector<1xf32>
    %106 = vector.shape_cast %105 : vector<1xf32> to vector<1x1x1xf32>
    %107 = vector.extract %106[0, 0, 0] : f32 from vector<1x1x1xf32>
    %108 = vector.broadcast %107 : f32 to vector<1x1xf32>
    %cst_16 = arith.constant 1.000000e+00 : f32
    %109 = vector.broadcast %cst_16 : f32 to vector<1x1xf32>
    %110 = arith.mulf %109, %103 : vector<1x1xf32>
    %111 = tpu.reciprocal %108 {approx = true} : vector<1x1xf32> -> vector<1x1xf32>
    %112 = arith.mulf %110, %111 : vector<1x1xf32>
    %c0_17 = arith.constant 0 : index
    %c0_18 = arith.constant 0 : index
    %c0_19 = arith.constant 0 : index
    %113 = vector.load %arg4[%c0_17, %c0_18, %c0_19] : memref<1x4x6xf32, #tpu.memory_space<vmem>>, vector<1x4x6xf32>
    %114 = vector.shape_cast %113 : vector<1x4x6xf32> to vector<4x6xf32>
    %c0_20 = arith.constant 0 : index
    %c0_21 = arith.constant 0 : index
    %115 = vector.load %arg5[%c0_20, %c0_21] : memref<4x6xf32, #tpu.memory_space<vmem>>, vector<4x6xf32>
    %c0_22 = arith.constant 0 : index
    %c0_23 = arith.constant 0 : index
    %c0_24 = arith.constant 0 : index
    %116 = vector.load %arg6[%c0_22, %c0_23, %c0_24] : memref<1x5x6xf32, #tpu.memory_space<vmem>>, vector<1x5x6xf32>
    %117 = vector.shape_cast %116 : vector<1x5x6xf32> to vector<5x6xf32>
    %c0_25 = arith.constant 0 : index
    %c0_26 = arith.constant 0 : index
    %118 = vector.load %arg7[%c0_25, %c0_26] : memref<1x6xi32, #tpu.memory_space<vmem>>, vector<1x6xi32>
    %c0_27 = arith.constant 0 : index
    %c0_28 = arith.constant 0 : index
    %119 = vector.load %arg8[%c0_27, %c0_28] : memref<1x6xf32, #tpu.memory_space<vmem>>, vector<1x6xf32>
    %120 = vector.shape_cast %119 : vector<1x6xf32> to vector<1x1x6xf32>
    %cst_29 = arith.constant dense<0.000000e+00> : vector<1xf32>
    %121 = vector.multi_reduction <add>, %120, %cst_29 [1, 2] : vector<1x1x6xf32> to vector<1xf32>
    %122 = vector.shape_cast %121 : vector<1xf32> to vector<1x1x1xf32>
    %123 = vector.extract %122[0, 0, 0] : f32 from vector<1x1x1xf32>
    %124 = vector.broadcast %123 : f32 to vector<1x1xf32>
    %cst_30 = arith.constant 9.99999997E-7 : f32
    %125 = vector.broadcast %cst_30 : f32 to vector<1x1xf32>
    %126 = arith.addf %124, %125 : vector<1x1xf32>
    %127 = tpu.reciprocal %126 {approx = true} : vector<1x1xf32> -> vector<1x1xf32>
    %128 = arith.subf %114, %115 : vector<4x6xf32>
    %129 = math.absf %128 : vector<4x6xf32>
    %130 = vector.broadcast %119 : vector<1x6xf32> to vector<4x6xf32>
    %131 = arith.mulf %129, %130 : vector<4x6xf32>
    %132 = vector.shape_cast %131 : vector<4x6xf32> to vector<1x4x6xf32>
    %cst_31 = arith.constant dense<0.000000e+00> : vector<1xf32>
    %133 = vector.multi_reduction <add>, %132, %cst_31 [1, 2] : vector<1x4x6xf32> to vector<1xf32>
    %134 = vector.shape_cast %133 : vector<1xf32> to vector<1x1x1xf32>
    %135 = vector.extract %134[0, 0, 0] : f32 from vector<1x1x1xf32>
    %136 = vector.broadcast %135 : f32 to vector<1x1xf32>
    %cst_32 = arith.constant 5.000000e+00 : f32
    %137 = vector.broadcast %cst_32 : f32 to vector<1x1xf32>
    %138 = arith.mulf %137, %136 : vector<1x1xf32>
    %139 = arith.mulf %138, %127 : vector<1x1xf32>
    %140 = vector.extract_strided_slice %114 {offsets = [0, 0], sizes = [1, 6], strides = [1, 1]} : vector<4x6xf32> to vector<1x6xf32>
    %141 = vector.extract_strided_slice %114 {offsets = [1, 0], sizes = [1, 6], strides = [1, 1]} : vector<4x6xf32> to vector<1x6xf32>
    %142 = vector.extract_strided_slice %114 {offsets = [2, 0], sizes = [1, 6], strides = [1, 1]} : vector<4x6xf32> to vector<1x6xf32>
    %143 = vector.extract_strided_slice %114 {offsets = [3, 0], sizes = [1, 6], strides = [1, 1]} : vector<4x6xf32> to vector<1x6xf32>
    %cst_33 = arith.constant 5.000000e-01 : f32
    %144 = vector.broadcast %cst_33 : f32 to vector<1x6xf32>
    %145 = arith.mulf %144, %142 : vector<1x6xf32>
    %146 = arith.subf %140, %145 : vector<1x6xf32>
    %cst_34 = arith.constant 5.000000e-01 : f32
    %147 = vector.broadcast %cst_34 : f32 to vector<1x6xf32>
    %148 = arith.mulf %147, %143 : vector<1x6xf32>
    %149 = arith.subf %141, %148 : vector<1x6xf32>
    %cst_35 = arith.constant 5.000000e-01 : f32
    %150 = vector.broadcast %cst_35 : f32 to vector<1x6xf32>
    %151 = arith.mulf %150, %142 : vector<1x6xf32>
    %152 = arith.addf %140, %151 : vector<1x6xf32>
    %cst_36 = arith.constant 5.000000e-01 : f32
    %153 = vector.broadcast %cst_36 : f32 to vector<1x6xf32>
    %154 = arith.mulf %153, %143 : vector<1x6xf32>
    %155 = arith.addf %141, %154 : vector<1x6xf32>
    %156 = vector.extract_strided_slice %115 {offsets = [0, 0], sizes = [1, 6], strides = [1, 1]} : vector<4x6xf32> to vector<1x6xf32>
    %157 = vector.extract_strided_slice %115 {offsets = [1, 0], sizes = [1, 6], strides = [1, 1]} : vector<4x6xf32> to vector<1x6xf32>
    %158 = vector.extract_strided_slice %115 {offsets = [2, 0], sizes = [1, 6], strides = [1, 1]} : vector<4x6xf32> to vector<1x6xf32>
    %159 = vector.extract_strided_slice %115 {offsets = [3, 0], sizes = [1, 6], strides = [1, 1]} : vector<4x6xf32> to vector<1x6xf32>
    %cst_37 = arith.constant 5.000000e-01 : f32
    %160 = vector.broadcast %cst_37 : f32 to vector<1x6xf32>
    %161 = arith.mulf %160, %158 : vector<1x6xf32>
    %162 = arith.subf %156, %161 : vector<1x6xf32>
    %cst_38 = arith.constant 5.000000e-01 : f32
    %163 = vector.broadcast %cst_38 : f32 to vector<1x6xf32>
    %164 = arith.mulf %163, %159 : vector<1x6xf32>
    %165 = arith.subf %157, %164 : vector<1x6xf32>
    %cst_39 = arith.constant 5.000000e-01 : f32
    %166 = vector.broadcast %cst_39 : f32 to vector<1x6xf32>
    %167 = arith.mulf %166, %158 : vector<1x6xf32>
    %168 = arith.addf %156, %167 : vector<1x6xf32>
    %cst_40 = arith.constant 5.000000e-01 : f32
    %169 = vector.broadcast %cst_40 : f32 to vector<1x6xf32>
    %170 = arith.mulf %169, %159 : vector<1x6xf32>
    %171 = arith.addf %157, %170 : vector<1x6xf32>
    %172 = arith.subf %152, %146 : vector<1x6xf32>
    %173 = arith.subf %155, %149 : vector<1x6xf32>
    %174 = arith.mulf %172, %173 : vector<1x6xf32>
    %175 = arith.subf %168, %162 : vector<1x6xf32>
    %176 = arith.subf %171, %165 : vector<1x6xf32>
    %177 = arith.mulf %175, %176 : vector<1x6xf32>
    %178 = arith.minimumf %152, %168 : vector<1x6xf32>
    %179 = arith.maximumf %146, %162 : vector<1x6xf32>
    %180 = arith.subf %178, %179 : vector<1x6xf32>
    %cst_41 = arith.constant 0.000000e+00 : f32
    %181 = vector.broadcast %cst_41 : f32 to vector<1x6xf32>
    %182 = arith.maximumf %180, %181 : vector<1x6xf32>
    %183 = arith.minimumf %155, %171 : vector<1x6xf32>
    %184 = arith.maximumf %149, %165 : vector<1x6xf32>
    %185 = arith.subf %183, %184 : vector<1x6xf32>
    %cst_42 = arith.constant 0.000000e+00 : f32
    %186 = vector.broadcast %cst_42 : f32 to vector<1x6xf32>
    %187 = arith.maximumf %185, %186 : vector<1x6xf32>
    %188 = arith.mulf %182, %187 : vector<1x6xf32>
    %189 = arith.addf %174, %177 : vector<1x6xf32>
    %190 = arith.subf %189, %188 : vector<1x6xf32>
    %191 = arith.maximumf %152, %168 : vector<1x6xf32>
    %192 = arith.minimumf %146, %162 : vector<1x6xf32>
    %193 = arith.subf %191, %192 : vector<1x6xf32>
    %194 = arith.maximumf %155, %171 : vector<1x6xf32>
    %195 = arith.minimumf %149, %165 : vector<1x6xf32>
    %196 = arith.subf %194, %195 : vector<1x6xf32>
    %197 = arith.mulf %193, %196 : vector<1x6xf32>
    %cst_43 = arith.constant 0.000000e+00 : f32
    %198 = vector.broadcast %cst_43 : f32 to vector<1x6xf32>
    %199 = arith.cmpf ogt, %119, %198 : vector<1x6xf32>
    %cst_44 = arith.constant 0.000000e+00 : f32
    %200 = vector.broadcast %cst_44 : f32 to vector<1x6xf32>
    %201 = arith.cmpf ogt, %190, %200 : vector<1x6xf32>
    %202 = arith.andi %199, %201 : vector<1x6xi1>
    %cst_45 = arith.constant 1.000000e+00 : f32
    %203 = vector.broadcast %cst_45 : f32 to vector<1x6xf32>
    %204 = arith.select %202, %190, %203 : vector<1x6xi1>, vector<1x6xf32>
    %cst_46 = arith.constant 0.000000e+00 : f32
    %205 = vector.broadcast %cst_46 : f32 to vector<1x6xf32>
    %206 = arith.cmpf ogt, %197, %205 : vector<1x6xf32>
    %207 = arith.andi %199, %206 : vector<1x6xi1>
    %cst_47 = arith.constant 1.000000e+00 : f32
    %208 = vector.broadcast %cst_47 : f32 to vector<1x6xf32>
    %209 = arith.select %207, %197, %208 : vector<1x6xi1>, vector<1x6xf32>
    %210 = tpu.reciprocal %204 {approx = true} : vector<1x6xf32> -> vector<1x6xf32>
    %211 = arith.mulf %188, %210 : vector<1x6xf32>
    %cst_48 = arith.constant 0.000000e+00 : f32
    %212 = vector.broadcast %cst_48 : f32 to vector<1x6xf32>
    %213 = arith.select %199, %211, %212 : vector<1x6xi1>, vector<1x6xf32>
    %214 = arith.subf %197, %190 : vector<1x6xf32>
    %215 = tpu.reciprocal %209 {approx = true} : vector<1x6xf32> -> vector<1x6xf32>
    %216 = arith.mulf %214, %215 : vector<1x6xf32>
    %217 = arith.subf %213, %216 : vector<1x6xf32>
    %cst_49 = arith.constant 0.000000e+00 : f32
    %218 = vector.broadcast %cst_49 : f32 to vector<1x6xf32>
    %219 = arith.select %199, %217, %218 : vector<1x6xi1>, vector<1x6xf32>
    %cst_50 = arith.constant 1.000000e+00 : f32
    %220 = vector.broadcast %cst_50 : f32 to vector<1x6xf32>
    %221 = arith.subf %220, %219 : vector<1x6xf32>
    %222 = arith.mulf %221, %119 : vector<1x6xf32>
    %223 = vector.shape_cast %222 : vector<1x6xf32> to vector<1x1x6xf32>
    %cst_51 = arith.constant dense<0.000000e+00> : vector<1xf32>
    %224 = vector.multi_reduction <add>, %223, %cst_51 [1, 2] : vector<1x1x6xf32> to vector<1xf32>
    %225 = vector.shape_cast %224 : vector<1xf32> to vector<1x1x1xf32>
    %226 = vector.extract %225[0, 0, 0] : f32 from vector<1x1x1xf32>
    %227 = vector.broadcast %226 : f32 to vector<1x1xf32>
    %cst_52 = arith.constant 2.000000e+00 : f32
    %228 = vector.broadcast %cst_52 : f32 to vector<1x1xf32>
    %229 = arith.mulf %228, %227 : vector<1x1xf32>
    %230 = arith.mulf %229, %127 : vector<1x1xf32>
    %231 = vector.extract_strided_slice %117 {offsets = [0, 0], sizes = [1, 6], strides = [1, 1]} : vector<5x6xf32> to vector<1x6xf32>
    %c0_i32_53 = arith.constant 0 : i32
    %232 = vector.broadcast %c0_i32_53 : i32 to vector<1x6xi32>
    %233 = vector.extract_strided_slice %117 {offsets = [1, 0], sizes = [1, 6], strides = [1, 1]} : vector<5x6xf32> to vector<1x6xf32>
    %234 = arith.cmpf ogt, %233, %231 : vector<1x6xf32>
    %235 = arith.select %234, %233, %231 : vector<1x6xi1>, vector<1x6xf32>
    %c1_i32_54 = arith.constant 1 : i32
    %236 = vector.broadcast %c1_i32_54 : i32 to vector<1x6xi32>
    %237 = arith.select %234, %236, %232 : vector<1x6xi1>, vector<1x6xi32>
    %238 = vector.extract_strided_slice %117 {offsets = [2, 0], sizes = [1, 6], strides = [1, 1]} : vector<5x6xf32> to vector<1x6xf32>
    %239 = arith.cmpf ogt, %238, %235 : vector<1x6xf32>
    %240 = arith.select %239, %238, %235 : vector<1x6xi1>, vector<1x6xf32>
    %c2_i32_55 = arith.constant 2 : i32
    %241 = vector.broadcast %c2_i32_55 : i32 to vector<1x6xi32>
    %242 = arith.select %239, %241, %237 : vector<1x6xi1>, vector<1x6xi32>
    %243 = vector.extract_strided_slice %117 {offsets = [3, 0], sizes = [1, 6], strides = [1, 1]} : vector<5x6xf32> to vector<1x6xf32>
    %244 = arith.cmpf ogt, %243, %240 : vector<1x6xf32>
    %245 = arith.select %244, %243, %240 : vector<1x6xi1>, vector<1x6xf32>
    %c3_i32_56 = arith.constant 3 : i32
    %246 = vector.broadcast %c3_i32_56 : i32 to vector<1x6xi32>
    %247 = arith.select %244, %246, %242 : vector<1x6xi1>, vector<1x6xi32>
    %248 = vector.extract_strided_slice %117 {offsets = [4, 0], sizes = [1, 6], strides = [1, 1]} : vector<5x6xf32> to vector<1x6xf32>
    %249 = arith.cmpf ogt, %248, %245 : vector<1x6xf32>
    %c4_i32_57 = arith.constant 4 : i32
    %250 = vector.broadcast %c4_i32_57 : i32 to vector<1x6xi32>
    %251 = arith.select %249, %250, %247 : vector<1x6xi1>, vector<1x6xi32>
    %252 = arith.cmpi eq, %251, %118 : vector<1x6xi32>
    %253 = arith.extui %252 : vector<1x6xi1> to vector<1x6xi32>
    %254 = arith.sitofp %253 : vector<1x6xi32> to vector<1x6xf32>
    %255 = arith.mulf %254, %119 : vector<1x6xf32>
    %256 = tpu.iota {dimensions = array<i32: 0>} : vector<10x1xi32>
    %257 = arith.sitofp %256 : vector<10x1xi32> to vector<10x1xf32>
    %cst_58 = arith.constant 5.000000e+00 : f32
    %258 = vector.broadcast %cst_58 : f32 to vector<10x1xf32>
    %259 = arith.mulf %258, %257 : vector<10x1xf32>
    %cst_59 = arith.constant 5.000000e+01 : f32
    %260 = vector.broadcast %cst_59 : f32 to vector<10x1xf32>
    %261 = arith.addf %260, %259 : vector<10x1xf32>
    %cst_60 = arith.constant 0.00999999977 : f32
    %262 = vector.broadcast %cst_60 : f32 to vector<10x1xf32>
    %263 = arith.mulf %262, %261 : vector<10x1xf32>
    %264 = vector.broadcast %213 : vector<1x6xf32> to vector<10x6xf32>
    %265 = vector.broadcast %263 : vector<10x1xf32> to vector<10x6xf32>
    %266 = arith.cmpf oge, %264, %265 : vector<10x6xf32>
    %267 = arith.extui %266 : vector<10x6xi1> to vector<10x6xi32>
    %268 = arith.sitofp %267 : vector<10x6xi32> to vector<10x6xf32>
    %269 = vector.broadcast %255 : vector<1x6xf32> to vector<10x6xf32>
    %270 = arith.mulf %268, %269 : vector<10x6xf32>
    %cst_61 = arith.constant dense<0.000000e+00> : vector<10xf32>
    %271 = vector.multi_reduction <add>, %270, %cst_61 [1] : vector<10x6xf32> to vector<10xf32>
    %272 = vector.shape_cast %271 : vector<10xf32> to vector<10x1xf32>
    %273 = vector.broadcast %127 : vector<1x1xf32> to vector<10x1xf32>
    %274 = arith.mulf %272, %273 : vector<10x1xf32>
    %275 = vector.shape_cast %274 : vector<10x1xf32> to vector<1x10x1xf32>
    %cst_62 = arith.constant dense<0.000000e+00> : vector<1xf32>
    %276 = vector.multi_reduction <add>, %275, %cst_62 [1, 2] : vector<1x10x1xf32> to vector<1xf32>
    %277 = vector.shape_cast %276 : vector<1xf32> to vector<1x1x1xf32>
    %278 = vector.extract %277[0, 0, 0] : f32 from vector<1x1x1xf32>
    %279 = vector.broadcast %278 : f32 to vector<1x1xf32>
    %cst_63 = arith.constant 1.000000e-01 : f32
    %280 = vector.broadcast %cst_63 : f32 to vector<1x1xf32>
    %281 = arith.mulf %279, %280 : vector<1x1xf32>
    %282 = vector.extract_strided_slice %274 {offsets = [0, 0], sizes = [1, 1], strides = [1, 1]} : vector<10x1xf32> to vector<1x1xf32>
    %283 = vector.extract_strided_slice %274 {offsets = [5, 0], sizes = [1, 1], strides = [1, 1]} : vector<10x1xf32> to vector<1x1xf32>
    %284 = vector.extract_strided_slice %274 {offsets = [9, 0], sizes = [1, 1], strides = [1, 1]} : vector<10x1xf32> to vector<1x1xf32>
    %285 = tpu.iota {dimensions = array<i32: 1>} : vector<8x128xi32>
    %286 = tpu.iota {dimensions = array<i32: 0>} : vector<8x128xi32>
    %cst_64 = arith.constant 0.000000e+00 : f32
    %287 = vector.broadcast %cst_64 : f32 to vector<8x128xf32>
    %c0_i32_65 = arith.constant 0 : i32
    %288 = vector.broadcast %c0_i32_65 : i32 to vector<8x128xi32>
    %289 = arith.cmpi eq, %286, %288 : vector<8x128xi32>
    %c0_i32_66 = arith.constant 0 : i32
    %290 = vector.broadcast %c0_i32_66 : i32 to vector<8x128xi32>
    %291 = arith.cmpi eq, %285, %290 : vector<8x128xi32>
    %292 = arith.andi %289, %291 : vector<8x128xi1>
    %293 = vector.shape_cast %112 : vector<1x1xf32> to vector<1x1xf32>
    %294 = vector.broadcast %293 : vector<1x1xf32> to vector<8x128xf32>
    %295 = arith.select %292, %294, %287 : vector<8x128xi1>, vector<8x128xf32>
    %c0_i32_67 = arith.constant 0 : i32
    %296 = vector.broadcast %c0_i32_67 : i32 to vector<8x128xi32>
    %297 = arith.cmpi eq, %286, %296 : vector<8x128xi32>
    %c1_i32_68 = arith.constant 1 : i32
    %298 = vector.broadcast %c1_i32_68 : i32 to vector<8x128xi32>
    %299 = arith.cmpi eq, %285, %298 : vector<8x128xi32>
    %300 = arith.andi %297, %299 : vector<8x128xi1>
    %301 = vector.shape_cast %139 : vector<1x1xf32> to vector<1x1xf32>
    %302 = vector.broadcast %301 : vector<1x1xf32> to vector<8x128xf32>
    %303 = arith.select %300, %302, %295 : vector<8x128xi1>, vector<8x128xf32>
    %c0_i32_69 = arith.constant 0 : i32
    %304 = vector.broadcast %c0_i32_69 : i32 to vector<8x128xi32>
    %305 = arith.cmpi eq, %286, %304 : vector<8x128xi32>
    %c2_i32_70 = arith.constant 2 : i32
    %306 = vector.broadcast %c2_i32_70 : i32 to vector<8x128xi32>
    %307 = arith.cmpi eq, %285, %306 : vector<8x128xi32>
    %308 = arith.andi %305, %307 : vector<8x128xi1>
    %309 = vector.shape_cast %230 : vector<1x1xf32> to vector<1x1xf32>
    %310 = vector.broadcast %309 : vector<1x1xf32> to vector<8x128xf32>
    %311 = arith.select %308, %310, %303 : vector<8x128xi1>, vector<8x128xf32>
    %c0_i32_71 = arith.constant 0 : i32
    %312 = vector.broadcast %c0_i32_71 : i32 to vector<8x128xi32>
    %313 = arith.cmpi eq, %286, %312 : vector<8x128xi32>
    %c3_i32_72 = arith.constant 3 : i32
    %314 = vector.broadcast %c3_i32_72 : i32 to vector<8x128xi32>
    %315 = arith.cmpi eq, %285, %314 : vector<8x128xi32>
    %316 = arith.andi %313, %315 : vector<8x128xi1>
    %317 = vector.shape_cast %281 : vector<1x1xf32> to vector<1x1xf32>
    %318 = vector.broadcast %317 : vector<1x1xf32> to vector<8x128xf32>
    %319 = arith.select %316, %318, %311 : vector<8x128xi1>, vector<8x128xf32>
    %c0_i32_73 = arith.constant 0 : i32
    %320 = vector.broadcast %c0_i32_73 : i32 to vector<8x128xi32>
    %321 = arith.cmpi eq, %286, %320 : vector<8x128xi32>
    %c4_i32_74 = arith.constant 4 : i32
    %322 = vector.broadcast %c4_i32_74 : i32 to vector<8x128xi32>
    %323 = arith.cmpi eq, %285, %322 : vector<8x128xi32>
    %324 = arith.andi %321, %323 : vector<8x128xi1>
    %325 = vector.shape_cast %282 : vector<1x1xf32> to vector<1x1xf32>
    %326 = vector.broadcast %325 : vector<1x1xf32> to vector<8x128xf32>
    %327 = arith.select %324, %326, %319 : vector<8x128xi1>, vector<8x128xf32>
    %c0_i32_75 = arith.constant 0 : i32
    %328 = vector.broadcast %c0_i32_75 : i32 to vector<8x128xi32>
    %329 = arith.cmpi eq, %286, %328 : vector<8x128xi32>
    %c5_i32 = arith.constant 5 : i32
    %330 = vector.broadcast %c5_i32 : i32 to vector<8x128xi32>
    %331 = arith.cmpi eq, %285, %330 : vector<8x128xi32>
    %332 = arith.andi %329, %331 : vector<8x128xi1>
    %333 = vector.shape_cast %283 : vector<1x1xf32> to vector<1x1xf32>
    %334 = vector.broadcast %333 : vector<1x1xf32> to vector<8x128xf32>
    %335 = arith.select %332, %334, %327 : vector<8x128xi1>, vector<8x128xf32>
    %c0_i32_76 = arith.constant 0 : i32
    %336 = vector.broadcast %c0_i32_76 : i32 to vector<8x128xi32>
    %337 = arith.cmpi eq, %286, %336 : vector<8x128xi32>
    %c6_i32 = arith.constant 6 : i32
    %338 = vector.broadcast %c6_i32 : i32 to vector<8x128xi32>
    %339 = arith.cmpi eq, %285, %338 : vector<8x128xi32>
    %340 = arith.andi %337, %339 : vector<8x128xi1>
    %341 = vector.shape_cast %284 : vector<1x1xf32> to vector<1x1xf32>
    %342 = vector.broadcast %341 : vector<1x1xf32> to vector<8x128xf32>
    %343 = arith.select %340, %342, %335 : vector<8x128xi1>, vector<8x128xf32>
    %c0_77 = arith.constant 0 : index
    %c0_78 = arith.constant 0 : index
    %c0_79 = arith.constant 0 : index
    %344 = vector.load %arg9[%c0_77, %c0_78, %c0_79] : memref<1x8x128xf32, #tpu.memory_space<vmem>>, vector<1x8x128xf32>
    %345 = vector.shape_cast %344 : vector<1x8x128xf32> to vector<8x128xf32>
    %346 = vector.shape_cast %343 : vector<8x128xf32> to vector<1x8x128xf32>
    tpu.vector_store %arg9[%c0_77, %c0_78, %c0_79], %346 {strides = array<i32>} : memref<1x8x128xf32, #tpu.memory_space<vmem>>, vector<1x8x128xf32>,
    return
  }
  func.func @transform_0(%arg0: i32) -> (i32, i32) {
    %c0_i32 = arith.constant 0 : i32
    %c0_i32_0 = arith.constant 0 : i32
    %c0_i32_1 = arith.constant 0 : i32
    return %c0_i32, %c0_i32_0 : i32, i32
  }
  func.func @transform_1(%arg0: i32) -> (i32, i32, i32) {
    %c0_i32 = arith.constant 0 : i32
    %c0_i32_0 = arith.constant 0 : i32
    %c0_i32_1 = arith.constant 0 : i32
    return %arg0, %c0_i32, %c0_i32_0 : i32, i32, i32
  }
  func.func @transform_2(%arg0: i32) -> (i32, i32, i32) {
    %c0_i32 = arith.constant 0 : i32
    %c0_i32_0 = arith.constant 0 : i32
    %c0_i32_1 = arith.constant 0 : i32
    return %arg0, %c0_i32, %c0_i32_0 : i32, i32, i32
  }
  func.func @transform_3(%arg0: i32) -> (i32, i32, i32) {
    %c0_i32 = arith.constant 0 : i32
    %c0_i32_0 = arith.constant 0 : i32
    %c0_i32_1 = arith.constant 0 : i32
    return %arg0, %c0_i32, %c0_i32_0 : i32, i32, i32
  }
  func.func @transform_4(%arg0: i32) -> (i32, i32) {
    %c0_i32 = arith.constant 0 : i32
    %c0_i32_0 = arith.constant 0 : i32
    %c0_i32_1 = arith.constant 0 : i32
    return %c0_i32, %c0_i32_0 : i32, i32
  }
  func.func @transform_5(%arg0: i32) -> (i32, i32, i32) {
    %c0_i32 = arith.constant 0 : i32
    %c0_i32_0 = arith.constant 0 : i32
    %c0_i32_1 = arith.constant 0 : i32
    return %arg0, %c0_i32, %c0_i32_0 : i32, i32, i32
  }
  func.func @transform_6(%arg0: i32) -> (i32, i32) {
    %c0_i32 = arith.constant 0 : i32
    %c0_i32_0 = arith.constant 0 : i32
    %c0_i32_1 = arith.constant 0 : i32
    return %c0_i32, %c0_i32_0 : i32, i32
  }
  func.func @transform_7(%arg0: i32) -> (i32, i32) {
    %c0_i32 = arith.constant 0 : i32
    %c0_i32_0 = arith.constant 0 : i32
    %c0_i32_1 = arith.constant 0 : i32
    return %c0_i32, %c0_i32_0 : i32, i32
  }
  func.func @transform_8(%arg0: i32) -> (i32, i32, i32) {
    %c0_i32 = arith.constant 0 : i32
    %c0_i32_0 = arith.constant 0 : i32
    %c0_i32_1 = arith.constant 0 : i32
    return %arg0, %c0_i32, %c0_i32_0 : i32, i32, i32
  }
}

</mosaic_0001>

<llo_original>
// kernel: neg.1
$region0: #{neg.1}
  #allocation0 [shape = 's32[1]{0}', space=sflag, size = 0x4, scoped, tag = 'scoped memory for neg.1']
  %s0 = inlined_call_operand.vmem [shape: f32[12,8], index: 0, kind: input, shape index: {}]
  %s1 = inlined_call_operand.vmem [shape: f32[12,8], index: 1, kind: output, shape index: {}]
  %v2 = vld [vmem:[%s0] sm:$0xff]
  %3 = xla_tuple %v2
  %4 = xla_tuple %3
  %v5 = vxor.u32 %v2, 2147483648
  %6 = xla_tuple %v5
  %7 = vst [vmem:[%s1] sm:$0xff] %v5
  %s8 = scalar_lea.vmem %s0, 8
  %v9 = vld [vmem:[%s8] sm:$0xff]
  %10 = xla_tuple %v9
  %11 = xla_tuple %10
  %v12 = vxor.u32 %v9, 2147483648
  %13 = xla_tuple %v12
  %s14 = scalar_lea.vmem %s1, 8
  %15 = vst [vmem:[%s14] sm:$0xff] %v12

// kernel: _criterion_packed.1
$region0: #{_criterion_packed.1}
  #allocation0 [shape = 'u32[]', space=smem, size = 0x4, offset = 0x4, fixed_abs, tag = 'smem constant byte address 0x4 - core index']
  #allocation1 [shape = 'u32[144,128]{1,0:T(1,128)}', space=vmem, size = 0x12000, scoped, tag = 'internal scratch']
  %s0 = inlined_call_operand.vmem [shape: f32[1,5], index: 0, kind: input, shape index: {}]
  %s1 = inlined_call_operand.vmem [shape: f32[2,5,16], index: 1, kind: input, shape index: {}]
  %s2 = inlined_call_operand.vmem [shape: s32[2,1,16], index: 2, kind: input, shape index: {}]
  %s3 = inlined_call_operand.vmem [shape: f32[2,4,6], index: 3, kind: input, shape index: {}]
  %s4 = inlined_call_operand.vmem [shape: f32[4,6], index: 4, kind: input, shape index: {}]
  %s5 = inlined_call_operand.vmem [shape: f32[2,5,6], index: 5, kind: input, shape index: {}]
  %s6 = inlined_call_operand.vmem [shape: s32[1,6], index: 6, kind: input, shape index: {}]
  %s7 = inlined_call_operand.vmem [shape: f32[1,6], index: 7, kind: input, shape index: {}]
  %s8 = inlined_call_operand.vmem [shape: f32[2,8,128], index: 8, kind: output, shape index: {}]
  %s9 = sld [smem:[#allocation0]]
  $region65: #{_criterion_packed.1} parent=0
    _
  %s11 = ssub.s32 1, %s9
  %s12 = scalar_select 0, %s11, %s9
  loop: start=0, step=1, limit=4
  $region2: #{_criterion_packed.1} parent=0 // loop_pre_header
    _
  $region3: #{_criterion_packed.1} parent=0 // loop_header
    %s14 = sphi 0, %s18
    %p15 = scmp.ge.s32.totalorder %s14, 4
    %s22 = sphi 0, %s22
    %s24 = sphi 0, %s22
    %s25 = sphi 0, %s24
    %s39 = sphi 0, %s25
    %s45 = sphi 0, %s47
    %s48 = sphi 0, %s45
    %s49 = sphi 0, %s48
    %s65 = sphi 0, %s49
    %s71 = sphi 0, %s73
    %s74 = sphi 0, %s71
    %s75 = sphi 0, %s74
    %s91 = sphi 0, %s75
    %s97 = sphi 0, %s99
    %s100 = sphi 0, %s97
    %s101 = sphi 0, %s100
    %s117 = sphi 0, %s101
    %s121 = sphi 0, %s121
    %s123 = sphi 0, %s121
    %s124 = sphi 0, %s123
    %s138 = sphi 0, %s124
    %s144 = sphi 0, %s146
    %s147 = sphi 0, %s144
    %s148 = sphi 0, %s147
    %s164 = sphi 0, %s148
    %s168 = sphi 0, %s168
    %s170 = sphi 0, %s168
    %s171 = sphi 0, %s170
    %s185 = sphi 0, %s171
    %s189 = sphi 0, %s189
    %s191 = sphi 0, %s189
    %s192 = sphi 0, %s191
    %s206 = sphi 0, %s192
    %s212 = sphi 0, %s214
    %s215 = sphi 0, %s212
    %s216 = sphi 0, %s215
    %s232 = sphi 0, %s216
  $region4: #{_criterion_packed.1} parent=0 // loop_header_branch
    %17 = sbr.rel (%p15) target = $region8
  $region5: #{_criterion_packed.1} parent=0 // loop_body
    %s19 = ssub.s32 %s14, 1
    %s20 = ssub.s32 %s14, 2
    %s21 = sadd.s32 %s14, 1
    %s23 = sadd.s32 %s22, 1
    %p26 = scmp.eq.s32.totalorder %s14, 1
    %p27 = scmp.ne.s32.totalorder %s22, %s24
    %p28 = scmp.eq.s32.totalorder %s14, 0
    %p29 = por %p27, %p28
    %p30 = scmp.ne.s32.totalorder %s22, %s24
    %p31 = scmp.eq.s32.totalorder %s19, 1
    %p32 = por %p30, %p31
    %p33 = scmp.ne.s32.totalorder %s24, %s25
    %p34 = scmp.eq.s32.totalorder %s19, 0
    %p35 = por %p33, %p34
    %p36 = scmp.ne.s32.totalorder %s24, %s25
    %p37 = scmp.eq.s32.totalorder %s20, 1
    %p38 = por %p36, %p37
    %p40 = scmp.ne.s32.totalorder %s25, %s39
    %p41 = scmp.eq.s32.totalorder %s20, 0
    %p42 = por %p40, %p41
    %s43 = ssub.s32 %s14, %s21
    %p44 = scmp.eq.s32.totalorder %s43, 0
    %s46 = sadd.s32 %s45, 1
    %s47 = scalar_select %p44, %s45, %s46
    %p50 = pneg %p44
    %p51 = scmp.eq.s32.totalorder %s14, 1
    %p52 = por %p50, %p51
    %p53 = scmp.ne.s32.totalorder %s45, %s48
    %p54 = scmp.eq.s32.totalorder %s14, 0
    %p55 = por %p53, %p54
    %p56 = scmp.ne.s32.totalorder %s45, %s48
    %p57 = scmp.eq.s32.totalorder %s19, 1
    %p58 = por %p56, %p57
    %p59 = scmp.ne.s32.totalorder %s48, %s49
    %p60 = scmp.eq.s32.totalorder %s19, 0
    %p61 = por %p59, %p60
    %p62 = scmp.ne.s32.totalorder %s48, %s49
    %p63 = scmp.eq.s32.totalorder %s20, 1
    %p64 = por %p62, %p63
    %p66 = scmp.ne.s32.totalorder %s49, %s65
    %p67 = scmp.eq.s32.totalorder %s20, 0
    %p68 = por %p66, %p67
    %s69 = ssub.s32 %s14, %s21
    %p70 = scmp.eq.s32.totalorder %s69, 0
    %s72 = sadd.s32 %s71, 1
    %s73 = scalar_select %p70, %s71, %s72
    %p76 = pneg %p70
    %p77 = scmp.eq.s32.totalorder %s14, 1
    %p78 = por %p76, %p77
    %p79 = scmp.ne.s32.totalorder %s71, %s74
    %p80 = scmp.eq.s32.totalorder %s14, 0
    %p81 = por %p79, %p80
    %p82 = scmp.ne.s32.totalorder %s71, %s74
    %p83 = scmp.eq.s32.totalorder %s19, 1
    %p84 = por %p82, %p83
    %p85 = scmp.ne.s32.totalorder %s74, %s75
    %p86 = scmp.eq.s32.totalorder %s19, 0
    %p87 = por %p85, %p86
    %p88 = scmp.ne.s32.totalorder %s74, %s75
    %p89 = scmp.eq.s32.totalorder %s20, 1
    %p90 = por %p88, %p89
    %p92 = scmp.ne.s32.totalorder %s75, %s91
    %p93 = scmp.eq.s32.totalorder %s20, 0
    %p94 = por %p92, %p93
    %s95 = ssub.s32 %s14, %s21
    %p96 = scmp.eq.s32.totalorder %s95, 0
    %s98 = sadd.s32 %s97, 1
    %s99 = scalar_select %p96, %s97, %s98
    %p102 = pneg %p96
    %p103 = scmp.eq.s32.totalorder %s14, 1
    %p104 = por %p102, %p103
    %p105 = scmp.ne.s32.totalorder %s97, %s100
    %p106 = scmp.eq.s32.totalorder %s14, 0
    %p107 = por %p105, %p106
    %p108 = scmp.ne.s32.totalorder %s97, %s100
    %p109 = scmp.eq.s32.totalorder %s19, 1
    %p110 = por %p108, %p109
    %p111 = scmp.ne.s32.totalorder %s100, %s101
    %p112 = scmp.eq.s32.totalorder %s19, 0
    %p113 = por %p111, %p112
    %p114 = scmp.ne.s32.totalorder %s100, %s101
    %p115 = scmp.eq.s32.totalorder %s20, 1
    %p116 = por %p114, %p115
    %p118 = scmp.ne.s32.totalorder %s101, %s117
    %p119 = scmp.eq.s32.totalorder %s20, 0
    %p120 = por %p118, %p119
    %s122 = sadd.s32 %s121, 1
    %p125 = scmp.eq.s32.totalorder %s14, 1
    %p126 = scmp.ne.s32.totalorder %s121, %s123
    %p127 = scmp.eq.s32.totalorder %s14, 0
    %p128 = por %p126, %p127
    %p129 = scmp.ne.s32.totalorder %s121, %s123
    %p130 = scmp.eq.s32.totalorder %s19, 1
    %p131 = por %p129, %p130
    %p132 = scmp.ne.s32.totalorder %s123, %s124
    %p133 = scmp.eq.s32.totalorder %s19, 0
    %p134 = por %p132, %p133
    %p135 = scmp.ne.s32.totalorder %s123, %s124
    %p136 = scmp.eq.s32.totalorder %s20, 1
    %p137 = por %p135, %p136
    %p139 = scmp.ne.s32.totalorder %s124, %s138
    %p140 = scmp.eq.s32.totalorder %s20, 0
    %p141 = por %p139, %p140
    %s142 = ssub.s32 %s14, %s21
    %p143 = scmp.eq.s32.totalorder %s142, 0
    %s145 = sadd.s32 %s144, 1
    %s146 = scalar_select %p143, %s144, %s145
    %p149 = pneg %p143
    %p150 = scmp.eq.s32.totalorder %s14, 1
    %p151 = por %p149, %p150
    %p152 = scmp.ne.s32.totalorder %s144, %s147
    %p153 = scmp.eq.s32.totalorder %s14, 0
    %p154 = por %p152, %p153
    %p155 = scmp.ne.s32.totalorder %s144, %s147
    %p156 = scmp.eq.s32.totalorder %s19, 1
    %p157 = por %p155, %p156
    %p158 = scmp.ne.s32.totalorder %s147, %s148
    %p159 = scmp.eq.s32.totalorder %s19, 0
    %p160 = por %p158, %p159
    %p161 = scmp.ne.s32.totalorder %s147, %s148
    %p162 = scmp.eq.s32.totalorder %s20, 1
    %p163 = por %p161, %p162
    %p165 = scmp.ne.s32.totalorder %s148, %s164
    %p166 = scmp.eq.s32.totalorder %s20, 0
    %p167 = por %p165, %p166
    %s169 = sadd.s32 %s168, 1
    %p172 = scmp.eq.s32.totalorder %s14, 1
    %p173 = scmp.ne.s32.totalorder %s168, %s170
    %p174 = scmp.eq.s32.totalorder %s14, 0
    %p175 = por %p173, %p174
    %p176 = scmp.ne.s32.totalorder %s168, %s170
    %p177 = scmp.eq.s32.totalorder %s19, 1
    %p178 = por %p176, %p177
    %p179 = scmp.ne.s32.totalorder %s170, %s171
    %p180 = scmp.eq.s32.totalorder %s19, 0
    %p181 = por %p179, %p180
    %p182 = scmp.ne.s32.totalorder %s170, %s171
    %p183 = scmp.eq.s32.totalorder %s20, 1
    %p184 = por %p182, %p183
    %p186 = scmp.ne.s32.totalorder %s171, %s185
    %p187 = scmp.eq.s32.totalorder %s20, 0
    %p188 = por %p186, %p187
    %s190 = sadd.s32 %s189, 1
    %p193 = scmp.eq.s32.totalorder %s14, 1
    %p194 = scmp.ne.s32.totalorder %s189, %s191
    %p195 = scmp.eq.s32.totalorder %s14, 0
    %p196 = por %p194, %p195
    %p197 = scmp.ne.s32.totalorder %s189, %s191
    %p198 = scmp.eq.s32.totalorder %s19, 1
    %p199 = por %p197, %p198
    %p200 = scmp.ne.s32.totalorder %s191, %s192
    %p201 = scmp.eq.s32.totalorder %s19, 0
    %p202 = por %p200, %p201
    %p203 = scmp.ne.s32.totalorder %s191, %s192
    %p204 = scmp.eq.s32.totalorder %s20, 1
    %p205 = por %p203, %p204
    %p207 = scmp.ne.s32.totalorder %s192, %s206
    %p208 = scmp.eq.s32.totalorder %s20, 0
    %p209 = por %p207, %p208
    %s210 = ssub.s32 %s14, %s21
    %p211 = scmp.eq.s32.totalorder %s210, 0
    %s213 = sadd.s32 %s212, 1
    %s214 = scalar_select %p211, %s212, %s213
    %p217 = pneg %p211
    %p218 = scmp.eq.s32.totalorder %s14, 1
    %p219 = por %p217, %p218
    %p220 = scmp.ne.s32.totalorder %s212, %s215
    %p221 = scmp.eq.s32.totalorder %s14, 0
    %p222 = por %p220, %p221
    %p223 = scmp.ne.s32.totalorder %s212, %s215
    %p224 = scmp.eq.s32.totalorder %s19, 1
    %p225 = por %p223, %p224
    %p226 = scmp.ne.s32.totalorder %s215, %s216
    %p227 = scmp.eq.s32.totalorder %s19, 0
    %p228 = por %p226, %p227
    %p229 = scmp.ne.s32.totalorder %s215, %s216
    %p230 = scmp.eq.s32.totalorder %s20, 1
    %p231 = por %p229, %p230
    %p233 = scmp.ne.s32.totalorder %s216, %s232
    %p234 = scmp.eq.s32.totalorder %s20, 0
    %p235 = por %p233, %p234
    %p236 = scmp.le.s32.totalorder 1, %s14
    %p237 = scmp.lt.s32.totalorder %s14, 3
    %p238 = pnand %p236, %p237
    %p239 = pneg %p238
    // Predicated region
    $region9: #{_criterion_packed.1} parent=5 // pred_check
      _
    $region10: #{_criterion_packed.1} parent=5 // pred_check_branch
      %241 = sbr.rel (%p238) target = $region12
    $region11: #{_criterion_packed.1} parent=5 // pred_region
      %s242 = ssub.s32 %s14, 1
      // Predicated region
      $region13: #{_criterion_packed.1} parent=11 // pred_check
        %p243 = pneg %p35
      $region14: #{_criterion_packed.1} parent=11 // pred_check_branch
        %245 = sbr.rel (%p243) target = $region16
      $region15: #{_criterion_packed.1} parent=11 // pred_region
        _
      $region16: #{_criterion_packed.1} parent=11 // pred_fallthru
        _
      // Predicated region
      $region17: #{_criterion_packed.1} parent=11 // pred_check
        %p246 = pneg %p134
      $region18: #{_criterion_packed.1} parent=11 // pred_check_branch
        %248 = sbr.rel (%p246) target = $region20
      $region19: #{_criterion_packed.1} parent=11 // pred_region
        _
      $region20: #{_criterion_packed.1} parent=11 // pred_fallthru
        _
      // Predicated region
      $region21: #{_criterion_packed.1} parent=11 // pred_check
        %p249 = pneg %p181
      $region22: #{_criterion_packed.1} parent=11 // pred_check_branch
        %251 = sbr.rel (%p249) target = $region24
      $region23: #{_criterion_packed.1} parent=11 // pred_region
        _
      $region24: #{_criterion_packed.1} parent=11 // pred_fallthru
        _
      // Predicated region
      $region25: #{_criterion_packed.1} parent=11 // pred_check
        %p252 = pneg %p202
      $region26: #{_criterion_packed.1} parent=11 // pred_check_branch
        %254 = sbr.rel (%p252) target = $region28
      $region27: #{_criterion_packed.1} parent=11 // pred_region
        _
      $region28: #{_criterion_packed.1} parent=11 // pred_fallthru
        _
    $region12: #{_criterion_packed.1} parent=5 // pred_fallthru
      _
    %p255 = scmp.lt.s32.totalorder %s14, 2
    // Predicated region
    $region29: #{_criterion_packed.1} parent=5 // pred_check
      %p256 = pneg %p255
    $region30: #{_criterion_packed.1} parent=5 // pred_check_branch
      %258 = sbr.rel (%p256) target = $region32
    $region31: #{_criterion_packed.1} parent=5 // pred_region
      // Predicated region
      $region33: #{_criterion_packed.1} parent=31 // pred_check
        %p259 = pneg %p55
      $region34: #{_criterion_packed.1} parent=31 // pred_check_branch
        %261 = sbr.rel (%p259) target = $region36
      $region35: #{_criterion_packed.1} parent=31 // pred_region
        %p262 = scmp.lt.s32.totalorder %s14, 1
        %s263 = scalar_select %p262, %s14, 1
        %s264 = smul.addr %s263, 8
        %s265 = scalar_lea.vmem %s1, %s264
      $region36: #{_criterion_packed.1} parent=31 // pred_fallthru
        _
      // Predicated region
      $region37: #{_criterion_packed.1} parent=31 // pred_check
        %p266 = pneg %p81
      $region38: #{_criterion_packed.1} parent=31 // pred_check_branch
        %268 = sbr.rel (%p266) target = $region40
      $region39: #{_criterion_packed.1} parent=31 // pred_region
        %p269 = scmp.lt.s32.totalorder %s14, 1
        %s270 = scalar_select %p269, %s14, 1
        %s271 = scalar_lea.vmem %s2, %s270
      $region40: #{_criterion_packed.1} parent=31 // pred_fallthru
        _
      // Predicated region
      $region41: #{_criterion_packed.1} parent=31 // pred_check
        %p272 = pneg %p107
      $region42: #{_criterion_packed.1} parent=31 // pred_check_branch
        %274 = sbr.rel (%p272) target = $region44
      $region43: #{_criterion_packed.1} parent=31 // pred_region
        %p275 = scmp.lt.s32.totalorder %s14, 1
        %s276 = scalar_select %p275, %s14, 1
        %s277 = smul.addr %s276, 4
        %s278 = scalar_lea.vmem %s3, %s277
      $region44: #{_criterion_packed.1} parent=31 // pred_fallthru
        _
      // Predicated region
      $region45: #{_criterion_packed.1} parent=31 // pred_check
        %p279 = pneg %p154
      $region46: #{_criterion_packed.1} parent=31 // pred_check_branch
        %281 = sbr.rel (%p279) target = $region48
      $region47: #{_criterion_packed.1} parent=31 // pred_region
        %p282 = scmp.lt.s32.totalorder %s14, 1
        %s283 = scalar_select %p282, %s14, 1
        %s284 = smul.addr %s283, 8
        %s285 = scalar_lea.vmem %s5, %s284
      $region48: #{_criterion_packed.1} parent=31 // pred_fallthru
        _
    $region32: #{_criterion_packed.1} parent=5 // pred_fallthru
      _
    %p286 = scmp.le.s32.totalorder 1, %s14
    %p287 = scmp.lt.s32.totalorder %s14, 3
    %p288 = pnand %p286, %p287
    %p289 = pneg %p288
    // Predicated region
    $region49: #{_criterion_packed.1} parent=5 // pred_check
      _
    $region50: #{_criterion_packed.1} parent=5 // pred_check_branch
      %291 = sbr.rel (%p288) target = $region52
    $region51: #{_criterion_packed.1} parent=5 // pred_region
      %s292 = ssub.s32 %s14, 1
      %p293 = pneg %p35
      %p294 = pneg %p32
      %p295 = scmp.lt.s32.totalorder %s19, 1
      %s296 = scalar_select %p295, %s19, 1
      %s297 = smul.addr %s296, 8
      %s298 = scalar_lea.vmem %s1, %s297
      %p299 = pneg %p61
      %p300 = pneg %p58
      %p301 = scmp.lt.s32.totalorder %s19, 1
      %s302 = scalar_select %p301, %s19, 1
      %s303 = scalar_lea.vmem %s2, %s302
      %p304 = pneg %p87
      %p305 = pneg %p84
      %p306 = scmp.lt.s32.totalorder %s19, 1
      %s307 = scalar_select %p306, %s19, 1
      %s308 = smul.addr %s307, 4
      %s309 = scalar_lea.vmem %s3, %s308
      %p310 = pneg %p113
      %p311 = pneg %p110
      %p312 = pneg %p134
      %p313 = pneg %p131
      %p314 = scmp.lt.s32.totalorder %s19, 1
      %s315 = scalar_select %p314, %s19, 1
      %s316 = smul.addr %s315, 8
      %s317 = scalar_lea.vmem %s5, %s316
      %p318 = pneg %p160
      %p319 = pneg %p157
      %p320 = pneg %p181
      %p321 = pneg %p178
      %p322 = pneg %p202
      %p323 = pneg %p199
      %p324 = pneg %p228
      %p325 = pneg %p225
      %p326 = scmp.lt.s32.totalorder %s19, 1
      %s327 = scalar_select %p326, %s19, 1
      %s328 = smul.addr %s327, 8
      %s329 = scalar_lea.vmem %s8, %s328
      %p330 = scmp.lt.s32.totalorder %s19, 1
      %s331 = scalar_select %p330, %s19, 1
      %s332 = smul.addr %s331, 8
      %s333 = scalar_lea.vmem %s1, %s332
      %p334 = scmp.lt.s32.totalorder %s19, 1
      %s335 = scalar_select %p334, %s19, 1
      %s336 = scalar_lea.vmem %s2, %s335
      %p337 = scmp.lt.s32.totalorder %s19, 1
      %s338 = scalar_select %p337, %s19, 1
      %s339 = smul.addr %s338, 4
      %s340 = scalar_lea.vmem %s3, %s339
      %p341 = scmp.lt.s32.totalorder %s19, 1
      %s342 = scalar_select %p341, %s19, 1
      %s343 = smul.addr %s342, 8
      %s344 = scalar_lea.vmem %s5, %s343
      %p345 = scmp.lt.s32.totalorder %s19, 1
      %s346 = scalar_select %p345, %s19, 1
      %s347 = smul.addr %s346, 8
      %s348 = scalar_lea.vmem %s8, %s347
      %v349 = vld [vmem:[%s333] sm:$0x1f]
      %v350 = vld [vmem:[%s336] sm:$0x1]
      %v351 = vld [vmem:[%s0] sm:$0x1]
      %v353 = vrot.slane %v349, 1
      %v355 = vmax.f32 %v349, %v353
      %v356 = vrot.slane %v349, 2
      %v358 = vmax.f32 %v355, %v356
      %v359 = vrot.slane %v349, 3
      %v361 = vmax.f32 %v358, %v359
      %v362 = vrot.slane %v349, 4
      %v364 = vmax.f32 %v361, %v362
      %v365 = vsub.f32 %v349, %v364
      %v366 = vmul.f32 %v365, 1.442695
      %v367 = vpow.pop %v366
      %v368 = vadd.f32 %v367, 0.0
      %v370 = vrot.slane %v364, 7
      %v372 = vsub.f32 %v349, %v370
      %v373 = vmul.f32 %v372, 1.442695
      %v374 = vpow.pop %v373
      %v376 = vrot.slane %v374, 1
      %v378 = vadd.f32 %v368, %v376
      %v379 = vrot.slane %v364, 6
      %v381 = vsub.f32 %v349, %v379
      %v382 = vmul.f32 %v381, 1.442695
      %v383 = vpow.pop %v382
      %v385 = vrot.slane %v383, 2
      %v387 = vadd.f32 %v378, %v385
      %v388 = vrot.slane %v364, 5
      %v390 = vsub.f32 %v349, %v388
      %v391 = vmul.f32 %v390, 1.442695
      %v392 = vpow.pop %v391
      %v394 = vrot.slane %v392, 3
      %v396 = vadd.f32 %v387, %v394
      %v397 = vrot.slane %v364, 4
      %v399 = vsub.f32 %v349, %v397
      %v400 = vmul.f32 %v399, 1.442695
      %v401 = vpow.pop %v400
      %v403 = vrot.slane %v401, 4
      %v405 = vadd.f32 %v396, %v403
      %v406 = vlog2.pop %v405
      %v407 = vmul.f32 %v406, 0.6931472
      %vm408 = vcmp.eq.s32.totalorder %v350, 0
      %v409 = vsub.f32 %v365, %v407
      %v410 = vsub.f32 0.0, %v409
      %v411 = vsel %vm408, %v410, 0.0
      %413 = vset.pattern.permute.xlu0 0
      %414 = vperm.xlu0 %413, %v351
      %v415 = vpop.permute.xlu0 %414
      %v417 = vlaneseq
      %v418 = vshrl.u32 %v417, 7
      %v419 = vsub.s32 0, %v418
      %v420 = vrot.slane %v415, %v419
      %v421 = vsel %vm408, %v420, 0.0
      %vm422 = vcmp.eq.s32.totalorder %v350, 1
      %v424 = vrot.slane %v407, 7
      %v426 = vsub.f32 %v372, %v424
      %v427 = vsub.f32 0.0, %v426
      %v430 = vunpack.c.l.s4 1966171168
      %v431 = vunpack.c.0.s8 %v430
      %v432 = vlaneseq
      %v433 = vshrl.u32 %v432, 7
      %v434 = vsub.s32 %v431, %v433
      %v435 = vrot.slane %v427, %v434
      %v436 = vcombine.high %v435, %v435
      %v438 = vunpack.c.l.s4 1966171168
      %v439 = vunpack.c.0.s8 %v438
      %v440 = vlaneseq
      %v441 = vshrl.u32 %v440, 7
      %v442 = vsub.s32 %v439, %v441
      %v443 = vrot.slane %v436, %v442
      %v445 = vsel %vm422, %v443, %v411
      %446 = vset.pattern.permute.xlu0 1
      %447 = vperm.xlu0 %446, %v351
      %v448 = vpop.permute.xlu0 %447
      %v450 = vlaneseq
      %v451 = vshrl.u32 %v450, 7
      %v452 = vsub.s32 0, %v451
      %v453 = vrot.slane %v448, %v452
      %v454 = vsel %vm422, %v453, %v421
      %vm455 = vcmp.eq.s32.totalorder %v350, 2
      %v456 = vrot.slane %v407, 6
      %v458 = vsub.f32 %v381, %v456
      %v459 = vsub.f32 0.0, %v458
      %v462 = vunpack.c.l.s4 1966171168
      %v463 = vunpack.c.0.s8 %v462
      %v464 = vlaneseq
      %v465 = vshrl.u32 %v464, 7
      %v466 = vsub.s32 %v463, %v465
      %v467 = vrot.slane %v459, %v466
      %v469 = vunpack.c.l.s4 1966171168
      %v470 = vunpack.c.0.s8 %v469
      %v471 = vlaneseq
      %v472 = vshrl.u32 %v471, 7
      %v473 = vsub.s32 %v470, %v472
      %v474 = vrot.slane %v467, %v473
      %v475 = vcombine.high %v474, %v474
      %v477 = vsel %vm455, %v475, %v445
      %478 = vset.pattern.permute.xlu0 2
      %479 = vperm.xlu0 %478, %v351
      %v480 = vpop.permute.xlu0 %479
      %v482 = vlaneseq
      %v483 = vshrl.u32 %v482, 7
      %v484 = vsub.s32 0, %v483
      %v485 = vrot.slane %v480, %v484
      %v486 = vsel %vm455, %v485, %v454
      %vm487 = vcmp.eq.s32.totalorder %v350, 3
      %v488 = vrot.slane %v407, 5
      %v490 = vsub.f32 %v390, %v488
      %v491 = vsub.f32 0.0, %v490
      %v494 = vunpack.c.l.s4 1966171168
      %v495 = vunpack.c.0.s8 %v494
      %v496 = vlaneseq
      %v497 = vshrl.u32 %v496, 7
      %v498 = vsub.s32 %v495, %v497
      %v499 = vrot.slane %v491, %v498
      %v500 = vcombine.high %v499, %v499
      %v502 = vunpack.c.l.s4 1966171168
      %v503 = vunpack.c.0.s8 %v502
      %v504 = vlaneseq
      %v505 = vshrl.u32 %v504, 7
      %v506 = vsub.s32 %v503, %v505
      %v507 = vrot.slane %v500, %v506
      %v508 = vcombine.high %v507, %v507
      %v510 = vsel %vm487, %v508, %v477
      %511 = vset.pattern.permute.xlu0 3
      %512 = vperm.xlu0 %511, %v351
      %v513 = vpop.permute.xlu0 %512
      %v515 = vlaneseq
      %v516 = vshrl.u32 %v515, 7
      %v517 = vsub.s32 0, %v516
      %v518 = vrot.slane %v513, %v517
      %v519 = vsel %vm487, %v518, %v486
      %vm520 = vcmp.eq.s32.totalorder %v350, 4
      %v521 = vrot.slane %v407, 4
      %v523 = vsub.f32 %v399, %v521
      %v524 = vsub.f32 0.0, %v523
      %v526 = vcombine.high %v524, %v524
      %v528 = vunpack.c.l.s4 1966171168
      %v529 = vunpack.c.0.s8 %v528
      %v530 = vlaneseq
      %v531 = vshrl.u32 %v530, 7
      %v532 = vsub.s32 %v529, %v531
      %v533 = vrot.slane %v526, %v532
      %v535 = vunpack.c.l.s4 1966171168
      %v536 = vunpack.c.0.s8 %v535
      %v537 = vlaneseq
      %v538 = vshrl.u32 %v537, 7
      %v539 = vsub.s32 %v536, %v538
      %v540 = vrot.slane %v533, %v539
      %v542 = vsel %vm520, %v540, %v510
      %543 = vset.pattern.permute.xlu0 4
      %544 = vperm.xlu0 %543, %v351
      %v545 = vpop.permute.xlu0 %544
      %v547 = vlaneseq
      %v548 = vshrl.u32 %v547, 7
      %v549 = vsub.s32 0, %v548
      %v550 = vrot.slane %v545, %v549
      %v551 = vsel %vm520, %v550, %v519
      %v552 = vmul.f32 %v551, %v542
      %vm553 = vcmask 122880
      %v554 = vsel %vm553, %v552, 0.0
      %555 = vadd.xlane.f32.xlu0 %v554
      %v556 = vpop.xlane.xlu0 %555
      %v557 = vrot.slane %v556, 4
      %v558 = vadd.f32 %v556, %v557
      %v559 = vrot.slane %v558, 2
      %v560 = vadd.f32 %v558, %v559
      %v561 = vrot.slane %v560, 1
      %v562 = vadd.f32 %v560, %v561
      %s563 = vtos %v562
      %v564 = vstv %s563
      %v565 = vsel %vm553, %v551, 0.0
      %566 = vadd.xlane.f32.xlu0 %v565
      %v567 = vpop.xlane.xlu0 %566
      %v568 = vrot.slane %v567, 4
      %v569 = vadd.f32 %v567, %v568
      %v570 = vrot.slane %v569, 2
      %v571 = vadd.f32 %v569, %v570
      %v572 = vrot.slane %v571, 1
      %v573 = vadd.f32 %v571, %v572
      %s574 = vtos %v573
      %v575 = vstv %s574
      %v576 = vrcp.pop %v575
      %v577 = vmul.f32 %v564, %v576
      %v578 = vld [vmem:[%s340] sm:$0xf]
      %v579 = vld [vmem:[%s4] sm:$0xf]
      %v580 = vld [vmem:[%s344] sm:$0x1f]
      %v581 = vld [vmem:[%s6] sm:$0x1]
      %v582 = vld [vmem:[%s7] sm:$0x1]
      %vm583 = vcmask 40960
      %v584 = vsel %vm583, %v582, 0.0
      %585 = vadd.xlane.f32.xlu0 %v584
      %v586 = vpop.xlane.xlu0 %585
      %v587 = vrot.slane %v586, 4
      %v588 = vadd.f32 %v586, %v587
      %v589 = vrot.slane %v588, 2
      %v590 = vadd.f32 %v588, %v589
      %v591 = vrot.slane %v590, 1
      %v592 = vadd.f32 %v590, %v591
      %s593 = vtos %v592
      %v594 = vstv %s593
      %v595 = vadd.f32 %v594, 1e-06
      %v596 = vrcp.pop %v595
      %v597 = vsub.f32 %v578, %v579
      %v598 = vand.u32 2147483647, %v597
      %v600 = vlaneseq
      %v601 = vshrl.u32 %v600, 7
      %v602 = vsub.s32 0, %v601
      %v603 = vrot.slane %v582, %v602
      %v605 = vmul.f32 %v598, %v603
      %vm606 = vcmask 44032
      %v607 = vsel %vm606, %v605, 0.0
      %608 = vadd.xlane.f32.xlu0 %v607
      %v609 = vpop.xlane.xlu0 %608
      %v610 = vrot.slane %v609, 4
      %v611 = vadd.f32 %v609, %v610
      %v612 = vrot.slane %v611, 2
      %v613 = vadd.f32 %v611, %v612
      %v614 = vrot.slane %v613, 1
      %v615 = vadd.f32 %v613, %v614
      %s616 = vtos %v615
      %v617 = vstv %s616
      %v618 = vmul.f32 %v617, 5.0
      %v619 = vmul.f32 %v618, %v596
      %v620 = vmul.f32 %v578, 0.5
      %v622 = vrot.slane %v620, 2
      %v624 = vsub.f32 %v578, %v622
      %v625 = vadd.f32 %v578, %v622
      %v626 = vmul.f32 %v579, 0.5
      %v628 = vrot.slane %v626, 2
      %v630 = vsub.f32 %v579, %v628
      %v631 = vadd.f32 %v579, %v628
      %v632 = vsub.f32 %v625, %v624
      %v634 = vrot.slane %v632, 1
      %v636 = vmul.f32 %v632, %v634
      %v637 = vsub.f32 %v631, %v630
      %v639 = vrot.slane %v637, 1
      %v641 = vmul.f32 %v637, %v639
      %v642 = vmin.f32 %v625, %v631
      %v643 = vmax.f32 %v624, %v630
      %v644 = vsub.f32 %v642, %v643
      %v645 = vmax.f32 %v644, 0.0
      %v647 = vrot.slane %v645, 1
      %v649 = vmul.f32 %v645, %v647
      %v650 = vadd.f32 %v636, %v641
      %v651 = vsub.f32 %v650, %v649
      %v652 = vmax.f32 %v625, %v631
      %v653 = vmin.f32 %v624, %v630
      %v654 = vsub.f32 %v652, %v653
      %v656 = vrot.slane %v654, 1
      %v658 = vmul.f32 %v654, %v656
      %vm659 = vcmp.gt.f32.partialorder %v582, 0.0
      %vm660 = vcmp.gt.f32.partialorder %v651, 0.0
      %vm661 = vmand %vm659, %vm660
      %v662 = vsel %vm661, %v651, 1.0
      %vm663 = vcmp.gt.f32.partialorder %v658, 0.0
      %vm664 = vmand %vm659, %vm663
      %v665 = vsel %vm664, %v658, 1.0
      %v666 = vrcp.pop %v662
      %v667 = vmul.f32 %v649, %v666
      %v668 = vsel %vm659, %v667, 0.0
      %v669 = vsub.f32 %v658, %v651
      %v670 = vrcp.pop %v665
      %v671 = vmul.f32 %v669, %v670
      %v672 = vsub.f32 %v668, %v671
      %v673 = vsel %vm659, %v672, 0.0
      %v674 = vsub.f32 1.0, %v673
      %v675 = vmul.f32 %v674, %v582
      %v676 = vsel %vm583, %v675, 0.0
      %677 = vadd.xlane.f32.xlu0 %v676
      %v678 = vpop.xlane.xlu0 %677
      %v679 = vrot.slane %v678, 4
      %v680 = vadd.f32 %v678, %v679
      %v681 = vrot.slane %v680, 2
      %v682 = vadd.f32 %v680, %v681
      %v683 = vrot.slane %v682, 1
      %v684 = vadd.f32 %v682, %v683
      %s685 = vtos %v684
      %v686 = vstv %s685
      %v687 = vmul.f32 %v686, 2.0
      %v688 = vmul.f32 %v687, %v596
      %v690 = vrot.slane %v580, 7
      %vm692 = vcmp.gt.f32.partialorder %v580, %v690
      %v693 = vsel %vm692, %v580, %v690
      %v694 = vsel %vm692, 1, 0
      %v696 = vrot.slane %v693, 7
      %vm698 = vcmp.gt.f32.partialorder %v580, %v696
      %v699 = vsel %vm698, %v580, %v696
      %v700 = vrot.slane %v694, 7
      %v701 = vsel %vm698, 2, %v700
      %v703 = vrot.slane %v699, 7
      %vm705 = vcmp.gt.f32.partialorder %v580, %v703
      %v706 = vsel %vm705, %v580, %v703
      %v707 = vrot.slane %v701, 7
      %v708 = vsel %vm705, 3, %v707
      %v710 = vrot.slane %v706, 7
      %vm712 = vcmp.gt.f32.partialorder %v580, %v710
      %v713 = vrot.slane %v708, 7
      %v714 = vsel %vm712, 4, %v713
      %v715 = vlaneseq
      %v716 = vshrl.u32 %v715, 7
      %v717 = vsub.s32 0, %v716
      %v718 = vrot.slane %v581, %v717
      %vm719 = vcmp.eq.s32.totalorder %v714, %v718
      %v720 = vsel %vm719, 1, 0
      %v721 = vcvt.s32.f32 %v720
      %v722 = vmul.f32 %v721, %v603
      %v723 = vlaneseq
      %v724 = vshrl.u32 %v723, 7
      %v725 = vadd.s32 %v724, 8
      %v726 = vcvt.s32.f32 %v724
      %v727 = vcvt.s32.f32 %v725
      %v728 = vmul.f32 %v726, 5.0
      %v729 = vmul.f32 %v727, 5.0
      %v730 = vadd.f32 %v728, 50.0
      %v731 = vadd.f32 %v729, 50.0
      %v732 = vmul.f32 %v730, 0.01
      %v733 = vmul.f32 %v731, 0.01
      %v735 = vlaneseq
      %v736 = vshrl.u32 %v735, 7
      %v737 = vsub.s32 0, %v736
      %v738 = vrot.slane %v668, %v737
      %vm740 = vcmp.ge.f32.partialorder %v738, %v732
      %vm741 = vcmp.ge.f32.partialorder %v738, %v733
      %v742 = vsel %vm740, 1, 0
      %v743 = vsel %vm741, 1, 0
      %v744 = vcvt.s32.f32 %v742
      %v745 = vcvt.s32.f32 %v743
      %v746 = vlaneseq
      %v747 = vshrl.u32 %v746, 7
      %v748 = vsub.s32 4, %v747
      %v749 = vrot.slane %v722, %v748
      %v750 = vmul.f32 %v744, %v749
      %v751 = vmul.f32 %v745, %v749
      %vm752 = vcmask 48128
      %v753 = vsel %vm752, %v750, 0.0
      %754 = vadd.xlane.f32.xlu0 %v753
      %v755 = vpop.xlane.xlu0 %754
      %vm756 = vcmask 41984
      %v757 = vsel %vm756, %v751, 0.0
      %758 = vadd.xlane.f32.xlu0 %v757
      %v759 = vpop.xlane.xlu0 %758
      %v760 = vmul.f32 %v755, %v596
      %v761 = vmul.f32 %v759, %v596
      %vm762 = vcmask 7168
      %v763 = vsel %vm762, %v760, 0.0
      %vm764 = vcmask 1024
      %v765 = vsel %vm764, %v761, 0.0
      %v766 = vadd.f32 %v763, %v765
      %767 = vadd.xlane.f32.xlu0 %v766
      %v768 = vpop.xlane.xlu0 %767
      %v769 = vrot.slane %v768, 4
      %v770 = vadd.f32 %v768, %v769
      %v771 = vrot.slane %v770, 2
      %v772 = vadd.f32 %v770, %v771
      %v773 = vrot.slane %v772, 1
      %v774 = vadd.f32 %v772, %v773
      %s775 = vtos %v774
      %v776 = vstv %s775
      %v777 = vmul.f32 %v776, 0.1
      %v778 = vlaneseq
      %v779 = vand.u32 %v778, 127
      %vm780 = vcmp.eq.s32.totalorder %v724, 0
      %vm781 = vcmp.eq.s32.totalorder %v779, 0
      %vm782 = vmand %vm780, %vm781
      %v783 = vsel %vm782, %v577, 0.0
      %vm784 = vcmp.eq.s32.totalorder %v779, 1
      %vm785 = vmand %vm780, %vm784
      %v786 = vsel %vm785, %v619, %v783
      %vm787 = vcmp.eq.s32.totalorder %v779, 2
      %vm788 = vmand %vm780, %vm787
      %v789 = vsel %vm788, %v688, %v786
      %vm790 = vcmp.eq.s32.totalorder %v779, 3
      %vm791 = vmand %vm780, %vm790
      %v792 = vsel %vm791, %v777, %v789
      %vm793 = vcmp.eq.s32.totalorder %v779, 4
      %vm794 = vmand %vm780, %vm793
      %v795 = vlaneseq
      %v796 = vshrl.u32 %v795, 7
      %v797 = vsub.s32 0, %v796
      %v798 = vrot.slane %v760, %v797
      %v799 = vsel %vm794, %v798, %v792
      %vm800 = vcmp.eq.s32.totalorder %v779, 5
      %vm801 = vmand %vm780, %vm800
      %v802 = vlaneseq
      %v803 = vshrl.u32 %v802, 7
      %v804 = vsub.s32 5, %v803
      %v805 = vrot.slane %v760, %v804
      %v806 = vsel %vm801, %v805, %v799
      %vm807 = vcmp.eq.s32.totalorder %v779, 6
      %vm808 = vmand %vm780, %vm807
      %v809 = vlaneseq
      %v810 = vshrl.u32 %v809, 7
      %v811 = vsub.s32 1, %v810
      %v812 = vrot.slane %v761, %v811
      %v813 = vsel %vm808, %v812, %v806
      %814 = vst [vmem:[%s348] sm:$0xff] %v813
      %p815 = scmp.lt.s32.totalorder %s19, 1
      %s816 = scalar_select %p815, %s19, 1
      %s817 = smul.addr %s816, 8
      %s818 = scalar_lea.vmem %s8, %s817
      // Predicated region
      $region53: #{_criterion_packed.1} parent=51 // pred_check
        %p819 = pneg %p225
      $region54: #{_criterion_packed.1} parent=51 // pred_check_branch
        %821 = sbr.rel (%p819) target = $region56
      $region55: #{_criterion_packed.1} parent=51 // pred_region
        _
      $region56: #{_criterion_packed.1} parent=51 // pred_fallthru
        _
    $region52: #{_criterion_packed.1} parent=5 // pred_fallthru
      _
    %p822 = scmp.le.s32.totalorder 2, %s14
    // Predicated region
    $region57: #{_criterion_packed.1} parent=5 // pred_check
      %p823 = pneg %p822
    $region58: #{_criterion_packed.1} parent=5 // pred_check_branch
      %825 = sbr.rel (%p823) target = $region60
    $region59: #{_criterion_packed.1} parent=5 // pred_region
      %s826 = ssub.s32 %s14, 2
      // Predicated region
      $region61: #{_criterion_packed.1} parent=59 // pred_check
        %p827 = pneg %p231
      $region62: #{_criterion_packed.1} parent=59 // pred_check_branch
        %829 = sbr.rel (%p827) target = $region64
      $region63: #{_criterion_packed.1} parent=59 // pred_region
        %p830 = scmp.lt.s32.totalorder %s20, 1
        %s831 = scalar_select %p830, %s20, 1
        %s832 = smul.addr %s831, 8
        %s833 = scalar_lea.vmem %s8, %s832
      $region64: #{_criterion_packed.1} parent=59 // pred_fallthru
        _
    $region60: #{_criterion_packed.1} parent=5 // pred_fallthru
      _
  $region6: #{_criterion_packed.1} parent=0 // loop_footer
    %s18 = sadd.s32 1, %s14
  $region7: #{_criterion_packed.1} parent=0 // loop_footer_branch
    %13 = sbr.rel target = $region3
  $region8: #{_criterion_packed.1} parent=0 // loop_exit
    _

</llo_original>
